<compile_context>
chip_gen: v6e
topology: v6e:2x2x1
jax: 0.10.0
libtpu: 0.0.40
codegen_flags: <defaults>
</compile_context>

<pallas_src>
import math

import numpy as np
import jax
import jax.numpy as jnp
from jax.experimental import pallas as pl
from jax.experimental.pallas import tpu as pltpu


# ----------------------------- kernel factory ---------------------------------
def _make_attn_kernel(channels, ganged, return_attn, approx_recip):
    """Build the Pallas kernel body.

    Block shapes seen by the kernel:
      q/k/v/out : (B, G, C)   (G = gang * S on the ganged path, else G = S)
      bias      : (1, G, G)   additive block-diagonal mask (ganged path only)
      attn      : (B, G, G)   (only when return_attn; then G == S)
    """
    scale = np.float32(1.0 / math.sqrt(channels))

    def kernel(*refs):
        if ganged:
            q_ref, k_ref, v_ref, bias_ref = refs[:4]
            rest = refs[4:]
        else:
            q_ref, k_ref, v_ref = refs[:3]
            bias_ref = None
            rest = refs[3:]
        out_ref = rest[0]
        attn_ref = rest[1] if return_attn else None

        q = q_ref[...]            # keep input dtype for the MXU (bf16 stays bf16)
        k = k_ref[...]
        v = v_ref[...]

        # Batched q @ k^T contracting the channel (last) dim directly: no k
        # transpose copy, f32 accumulation on the MXU.
        s = jnp.einsum("bsc,btc->bst", q, k,
                       preferred_element_type=jnp.float32)       # (B, G, G) f32
        s = s * scale

        if bias_ref is not None:
            # Block-diagonal mask: 0 within a ganged batch element, -1e30
            # across elements -> exp underflows to exactly 0 so the ganged
            # p @ v mixes nothing across batch elements.
            s = s + bias_ref[...]                                # (1,G,G) bcast

        # Numerically-stable softmax in f32 (per row -> no cross-row mixing,
        # which also keeps any garbage rows of a partial tail block confined).
        s_max = jnp.max(s, axis=-1, keepdims=True)
        p = jnp.exp(s - s_max)
        denom = jnp.sum(p, axis=-1, keepdims=True)
        p = p * pl.reciprocal(denom, approx=approx_recip)

        # Match torch: probabilities cast back to the input dtype before @ v
        # and before being returned (attn_float.type_as(attn)).
        p = p.astype(v.dtype)
        if attn_ref is not None:
            attn_ref[...] = p.astype(attn_ref.dtype)

        out = jnp.einsum("bst,btc->bsc", p, v,
                         preferred_element_type=jnp.float32)     # (B, G, C)
        out_ref[...] = out.astype(out_ref.dtype)

    return kernel


# ----------------------------- sizing helpers ---------------------------------
def _round_up(x, m):
    return ((x + m - 1) // m) * m


def _vmem_limit_bytes():
    """Scoped VMEM limit tuned per chip generation."""
    cap = 64 * 1024 * 1024                      # conservative fallback (v7x/TC)
    try:
        cap = int(getattr(pltpu.get_tpu_info(), "vmem_capacity_bytes", cap))
    except Exception:
        pass
    # ~48 MiB on 64 MiB parts (v7x), 96 MiB on 128 MiB parts (v5e / v6e).
    return int(min(cap * 3 // 4, 96 * 1024 * 1024))


def _choose_gang(n, s):
    """Largest divisor of N such that gang * S <= 128 (one MXU-native tile)."""
    g_cap = max(1, 128 // max(1, s))
    for g in range(min(g_cap, n), 0, -1):
        if n % g == 0:
            return g
    return 1


def _choose_block_rows(n_rows, seq, chans, dtype, with_attn, vmem_limit_bytes):
    """How many (possibly ganged) batch rows to process per grid step.

    Models the real (lane / sublane padded) VMEM footprint of one row:
    double-buffered q/k/v/out (+attn) tiles in the input dtype plus the f32
    score / probability intermediates.
    """
    isz = jnp.dtype(dtype).itemsize
    sub = max(8, 32 // isz)                    # sublane tile: 8 f32 / 16 bf16
    seq_s = _round_up(seq, sub)                # second-to-last dim padding
    c_lanes = _round_up(chans, 128)            # last dim -> 128 lanes
    seq_lanes = _round_up(seq, 128)

    io = (3 + 1) * seq_s * c_lanes * isz       # q, k, v, out tiles
    if with_attn:
        io += seq_s * seq_lanes * isz          # attn-probs tile
    io *= 2                                    # pipeline double-buffering
    scratch = 3 * _round_up(seq, 8) * seq_lanes * 4   # f32 score/prob temps

    per_row = io + scratch
    avail = max(0, vmem_limit_bytes - (4 << 20))      # compiler headroom
    rows = max(1, avail // per_row)
    if n_rows >= 2:
        # Keep >= 2 grid steps so the "parallel" axis can shard across v7x's
        # two TensorCores (and the pipeline has something to overlap).
        rows = min(rows, -(-n_rows // 2))
    return int(min(rows, n_rows))


# ----------------------------- pallas_call wrapper ----------------------------
def _attention_pallas(q, k, v, return_attn_probs):
    """q, k, v: [N, S, C] -> (out [N, S, C], attn [N, S, S] or None)."""
    N, S, C = q.shape
    dtype = q.dtype
    vmem_limit = _vmem_limit_bytes()

    # Gang several batch elements into one MXU tile on the fast path only
    # (the attn-returning path keeps per-element S x S probability blocks).
    gang = 1 if return_attn_probs else _choose_gang(N, S)
    G = gang * S
    n_rows = N // gang

    # Free, view-only reshapes (merge of adjacent leading dims, row-major).
    qg = q.reshape(n_rows, G, C)
    kg = k.reshape(n_rows, G, C)
    vg = v.reshape(n_rows, G, C)

    br = _choose_block_rows(n_rows, G, C, dtype, return_attn_probs, vmem_limit)
    grid = (pl.cdiv(n_rows, br),)              # no padding; tail block handled
                                               # by Pallas (masked writes)

    row_spec = pl.BlockSpec((br, G, C), lambda i: (i, 0, 0))
    in_specs = [row_spec, row_spec, row_spec]
    inputs = [qg, kg, vg]

    if gang > 1:
        # Static block-diagonal additive mask: 0 inside a ganged element,
        # -1e30 across elements.  Tiny (G x G) f32, read-only side input.
        gid = np.arange(G) // S
        bias = np.where(gid[:, None] == gid[None, :], 0.0, -1e30)
        bias = bias.astype(np.float32)[None]                     # (1, G, G)
        in_specs.append(pl.BlockSpec((1, G, G), lambda i: (0, 0, 0)))
        inputs.append(jnp.asarray(bias))

    kernel = _make_attn_kernel(
        channels=C,
        ganged=(gang > 1),
        return_attn=return_attn_probs,
        # Exact reciprocal when the probabilities are returned (they must sum
        # to 1); the cheap EUP approximation only on the out-only path.
        approx_recip=not return_attn_probs,
    )

    compiler_params = pltpu.CompilerParams(
        dimension_semantics=("parallel",),     # megacore sharding on v7x
        vmem_limit_bytes=vmem_limit,
    )

    if return_attn_probs:
        out, attn = pl.pallas_call(
            kernel,
            out_shape=(
                jax.ShapeDtypeStruct((n_rows, G, C), dtype),
                jax.ShapeDtypeStruct((n_rows, G, G), dtype),
            ),
            grid=grid,
            in_specs=in_specs,
            out_specs=(row_spec, pl.BlockSpec((br, G, G), lambda i: (i, 0, 0))),
            compiler_params=compiler_params,
        )(*inputs)
        return out.reshape(N, S, C), attn.reshape(N, S, S)   # gang == 1 here

    out = pl.pallas_call(
        kernel,
        out_shape=jax.ShapeDtypeStruct((n_rows, G, C), dtype),
        grid=grid,
        in_specs=in_specs,
        out_specs=row_spec,
        compiler_params=compiler_params,
    )(*inputs)
    return out.reshape(N, S, C), None


# ------------------------------ glue (plain JAX) ------------------------------
def shift_dim(x, src_dim, dest_dim):
    """Move dim `src_dim` to position `dest_dim`, preserving order of others."""
    n = x.ndim
    src = src_dim % n
    dest = dest_dim % n
    dims = list(range(n))
    dims.pop(src)
    dims.insert(dest, src)
    return jnp.transpose(x, dims)              # identity perm -> elided by XLA


def axial_attention(q, k, v, axial_dim, return_attn_probs=False):
    """JAX equivalent of AxialAttention(axial_dim).forward(q, k, v) (eval mode).

    The PyTorch module always returns (out, attn_probs); pass
    return_attn_probs=True to reproduce that exactly.  The default skips the
    N*S^2 attention-probability HBM writeback and uses the ganged fast path
    (pure bandwidth/issue savings for callers that ignore the probs).
    """
    ad = axial_dim + 2
    if ad >= q.ndim - 1:
        raise ValueError("axial dim does not match input shape")

    qs = shift_dim(q, ad, -2)
    ks = shift_dim(k, ad, -2)
    vs = shift_dim(v, ad, -2)
    old_shape = vs.shape
    N = int(np.prod(old_shape[:-2]))
    S, C = old_shape[-2], old_shape[-1]

    qf = qs.reshape(N, S, C)
    kf = ks.reshape(N, S, C)
    vf = vs.reshape(N, S, C)

    out, attn_probs = _attention_pallas(qf, kf, vf, return_attn_probs)

    out = out.reshape(old_shape)
    out = shift_dim(out, -2, ad)
    return out, attn_probs


# -------------------------------- reference -----------------------------------
def _reference(q, k, v, axial_dim):
    ad = axial_dim + 2
    qs = shift_dim(q, ad, -2)
    ks = shift_dim(k, ad, -2)
    vs = shift_dim(v, ad, -2)
    old_shape = vs.shape
    N = int(np.prod(old_shape[:-2]))
    S, C = old_shape[-2], old_shape[-1]
    qf = qs.reshape(N, S, C).astype(jnp.float32)
    kf = ks.reshape(N, S, C).astype(jnp.float32)
    vf = vs.reshape(N, S, C).astype(jnp.float32)
    attn = jnp.einsum("nsc,ntc->nst", qf, kf) / jnp.sqrt(jnp.float32(C))
    attn = jax.nn.softmax(attn, axis=-1)
    out = jnp.einsum("nst,ntc->nsc", attn, vf).reshape(old_shape)
    out = shift_dim(out, -2, ad)
    return out, attn


# ---------------------------------- main ---------------------------------------
if __name__ == "__main__":
    # [b, h, d1, d2, c] = [2, 2, 4, 8, 16]; attention over axial_dim=1 (d2).
    key = jax.random.PRNGKey(0)
    kq, kk, kv = jax.random.split(key, 3)
    b, h, d1, d2, c = 2, 2, 4, 8, 16
    axial_dim = 1

    q = jax.random.normal(kq, (b, h, d1, d2, c), dtype=jnp.float32)
    k = jax.random.normal(kk, (b, h, d1, d2, c), dtype=jnp.float32)
    v = jax.random.normal(kv, (b, h, d1, d2, c), dtype=jnp.float32)

    ref_out, ref_attn = _reference(q, k, v, axial_dim)

    # Module-fidelity path: returns (out, attn_probs) like AxialAttention.forward.
    out, attn = axial_attention(q, k, v, axial_dim, return_attn_probs=True)
    out = jax.block_until_ready(out)
    attn = jax.block_until_ready(attn)
    assert out.shape == (b, h, d1, d2, c)
    assert attn.shape == (b * h * d1, d2, d2)
    np.testing.assert_allclose(np.asarray(out), np.asarray(ref_out),
                               rtol=2e-3, atol=2e-3)
    np.testing.assert_allclose(np.asarray(attn), np.asarray(ref_attn),
                               rtol=2e-3, atol=2e-3)

    # Fast path (default): ganged block-diagonal MXU tiles, no attn writeback.
    out2, attn2 = axial_attention(q, k, v, axial_dim)
    out2 = jax.block_until_ready(out2)
    assert attn2 is None
    np.testing.assert_allclose(np.asarray(out2), np.asarray(ref_out),
                               rtol=2e-3, atol=2e-3)

    # bf16 inputs halve HBM traffic on this memory-bound kernel (softmax stays
    # f32 in-kernel).  Loose tolerance: inputs themselves are bf16-rounded.
    qb, kb, vb = (t.astype(jnp.bfloat16) for t in (q, k, v))
    out3, _ = axial_attention(qb, kb, vb, axial_dim)
    out3 = jax.block_until_ready(out3)
    out3_f32 = np.asarray(out3, dtype=np.float32)
    assert np.all(np.isfinite(out3_f32))
    np.testing.assert_allclose(out3_f32, np.asarray(ref_out), rtol=1e-1, atol=1e-1)

    print("KERNEL_OK")
</pallas_src>

<mosaic_0001>
module attributes {stable_mosaic.version = 11 : i64} {
  func.func @kernel(%arg0: i32, %arg1: memref<8x8x16xf32, #tpu.memory_space<vmem>>, %arg2: memref<8x8x16xf32, #tpu.memory_space<vmem>>, %arg3: memref<8x8x16xf32, #tpu.memory_space<vmem>>, %arg4: memref<8x8x16xf32, #tpu.memory_space<vmem>>, %arg5: memref<8x8x8xf32, #tpu.memory_space<vmem>>) attributes {dimension_semantics = [#tpu.dimension_semantics<parallel>], iteration_bounds = array<i64: 2>, scalar_prefetch = 0 : i64, scratch_operands = 0 : i64, tpu.core_type = #tpu.core_type<tc>, window_params = [{transform_indices = @transform_0, window_bounds = array<i64: 8, 8, 16>}, {transform_indices = @transform_1, window_bounds = array<i64: 8, 8, 16>}, {transform_indices = @transform_2, window_bounds = array<i64: 8, 8, 16>}, {transform_indices = @transform_3, window_bounds = array<i64: 8, 8, 16>}, {transform_indices = @transform_4, window_bounds = array<i64: 8, 8, 8>}]} {
    %c0 = arith.constant 0 : index
    %c0_0 = arith.constant 0 : index
    %c0_1 = arith.constant 0 : index
    %0 = vector.load %arg1[%c0, %c0_0, %c0_1] : memref<8x8x16xf32, #tpu.memory_space<vmem>>, vector<8x8x16xf32>
    %c0_2 = arith.constant 0 : index
    %c0_3 = arith.constant 0 : index
    %c0_4 = arith.constant 0 : index
    %1 = vector.load %arg2[%c0_2, %c0_3, %c0_4] : memref<8x8x16xf32, #tpu.memory_space<vmem>>, vector<8x8x16xf32>
    %c0_5 = arith.constant 0 : index
    %c0_6 = arith.constant 0 : index
    %c0_7 = arith.constant 0 : index
    %2 = vector.load %arg3[%c0_5, %c0_6, %c0_7] : memref<8x8x16xf32, #tpu.memory_space<vmem>>, vector<8x8x16xf32>
    "tpu.trace_start"() <{level = 10 : i32, message = "bsc,btc->bst"}> : () -> ()
    %cst = arith.constant dense<0.000000e+00> : vector<8x8x8xf32>
    %3 = tpu.matmul %0, %1, %cst {dimension_numbers = #tpu.dot_dimension_numbers<[2], [2], [1], [1], [0, 0, 0, 1, 1, 1], [0], [0]>} : vector<8x8x16xf32>, vector<8x8x16xf32>, vector<8x8x8xf32> -> vector<8x8x8xf32>
    "tpu.trace_stop"() : () -> ()
    %cst_8 = arith.constant 2.500000e-01 : f32
    %4 = vector.broadcast %cst_8 : f32 to vector<8x8x8xf32>
    %5 = arith.mulf %3, %4 : vector<8x8x8xf32>
    %cst_9 = arith.constant dense<0xFF800000> : vector<8x8xf32>
    %6 = vector.multi_reduction <maximumf>, %5, %cst_9 [2] : vector<8x8x8xf32> to vector<8x8xf32>
    %7 = vector.shape_cast %6 : vector<8x8xf32> to vector<8x8x1xf32>
    %8 = vector.broadcast %7 : vector<8x8x1xf32> to vector<8x8x8xf32>
    %9 = arith.subf %5, %8 : vector<8x8x8xf32>
    %10 = math.exp %9 : vector<8x8x8xf32>
    %cst_10 = arith.constant dense<0.000000e+00> : vector<8x8xf32>
    %11 = vector.multi_reduction <add>, %10, %cst_10 [2] : vector<8x8x8xf32> to vector<8x8xf32>
    %12 = vector.shape_cast %11 : vector<8x8xf32> to vector<8x8x1xf32>
    %13 = tpu.reciprocal %12 : vector<8x8x1xf32> -> vector<8x8x1xf32>
    %14 = vector.broadcast %13 : vector<8x8x1xf32> to vector<8x8x8xf32>
    %15 = arith.mulf %10, %14 : vector<8x8x8xf32>
    %c0_11 = arith.constant 0 : index
    %c0_12 = arith.constant 0 : index
    %c0_13 = arith.constant 0 : index
    %16 = vector.load %arg5[%c0_11, %c0_12, %c0_13] : memref<8x8x8xf32, #tpu.memory_space<vmem>>, vector<8x8x8xf32>
    tpu.vector_store %arg5[%c0_11, %c0_12, %c0_13], %15 {strides = array<i32>} : memref<8x8x8xf32, #tpu.memory_space<vmem>>, vector<8x8x8xf32>,
    "tpu.trace_start"() <{level = 10 : i32, message = "bst,btc->bsc"}> : () -> ()
    %cst_14 = arith.constant dense<0.000000e+00> : vector<8x8x16xf32>
    %17 = tpu.matmul %15, %2, %cst_14 {dimension_numbers = #tpu.dot_dimension_numbers<[2], [1], [1], [2], [0, 0, 0, 1, 1, 2], [0], [0]>} : vector<8x8x8xf32>, vector<8x8x16xf32>, vector<8x8x16xf32> -> vector<8x8x16xf32>
    "tpu.trace_stop"() : () -> ()
    %c0_15 = arith.constant 0 : index
    %c0_16 = arith.constant 0 : index
    %c0_17 = arith.constant 0 : index
    %18 = vector.load %arg4[%c0_15, %c0_16, %c0_17] : memref<8x8x16xf32, #tpu.memory_space<vmem>>, vector<8x8x16xf32>
    tpu.vector_store %arg4[%c0_15, %c0_16, %c0_17], %17 {strides = array<i32>} : memref<8x8x16xf32, #tpu.memory_space<vmem>>, vector<8x8x16xf32>,
    return
  }
  func.func @transform_0(%arg0: i32) -> (i32, i32, i32) {
    %c0_i32 = arith.constant 0 : i32
    %c0_i32_0 = arith.constant 0 : i32
    %c0_i32_1 = arith.constant 0 : i32
    return %arg0, %c0_i32, %c0_i32_0 : i32, i32, i32
  }
  func.func @transform_1(%arg0: i32) -> (i32, i32, i32) {
    %c0_i32 = arith.constant 0 : i32
    %c0_i32_0 = arith.constant 0 : i32
    %c0_i32_1 = arith.constant 0 : i32
    return %arg0, %c0_i32, %c0_i32_0 : i32, i32, i32
  }
  func.func @transform_2(%arg0: i32) -> (i32, i32, i32) {
    %c0_i32 = arith.constant 0 : i32
    %c0_i32_0 = arith.constant 0 : i32
    %c0_i32_1 = arith.constant 0 : i32
    return %arg0, %c0_i32, %c0_i32_0 : i32, i32, i32
  }
  func.func @transform_3(%arg0: i32) -> (i32, i32, i32) {
    %c0_i32 = arith.constant 0 : i32
    %c0_i32_0 = arith.constant 0 : i32
    %c0_i32_1 = arith.constant 0 : i32
    return %arg0, %c0_i32, %c0_i32_0 : i32, i32, i32
  }
  func.func @transform_4(%arg0: i32) -> (i32, i32, i32) {
    %c0_i32 = arith.constant 0 : i32
    %c0_i32_0 = arith.constant 0 : i32
    %c0_i32_1 = arith.constant 0 : i32
    return %arg0, %c0_i32, %c0_i32_0 : i32, i32, i32
  }
}

</mosaic_0001>

<llo_original>
// kernel: tpu_custom_call.1
$region0: #{tpu_custom_call.1}
  #allocation0 [shape = 'u32[]', space=smem, size = 0x4, offset = 0x4, fixed_abs, tag = 'smem constant byte address 0x4 - core index']
  #allocation1 [shape = 'u32[144,128]{1,0:T(1,128)}', space=vmem, size = 0x12000, scoped, tag = 'internal scratch']
  %s0 = inlined_call_operand.hbm [shape: f32[16,8,16], index: 0, kind: input, shape index: {}]
  %s1 = inlined_call_operand.hbm [shape: f32[16,8,16], index: 1, kind: input, shape index: {}]
  %s2 = inlined_call_operand.hbm [shape: f32[16,8,16], index: 2, kind: input, shape index: {}]
  %s3 = inlined_call_operand.hbm [shape: f32[16,8,16], index: 3, kind: output, shape index: {0}]
  %s4 = inlined_call_operand.vmem [shape: f32[16,8,8], index: 4, kind: output, shape index: {1}]
  %5 = xla_tuple %s3, %s4
  %s6 = sld [smem:[#allocation0]]
  $region65: #{tpu_custom_call.1} parent=0
    _
  %s8 = ssub.s32 1, %s6
  %s9 = scalar_select 0, %s8, %s6
  $region1: #{tpu_custom_call.1} parent=0
    #allocation2 [shape = 'u8[65536]{0}', space=vmem, size = 0x10000, scoped, tag = 'input window, operand 0']
    #allocation3 [shape = 's32[2]{0}', space=sflag, size = 0x8, scoped, tag = 'scoped memory for tpu_custom_call.1']
    #allocation4 [shape = 's32[2]{0}', space=sflag, size = 0x8, scoped, tag = 'scoped memory for tpu_custom_call.1']
    #allocation5 [shape = 'u8[65536]{0}', space=vmem, size = 0x10000, scoped, tag = 'input window, operand 1']
    #allocation6 [shape = 's32[2]{0}', space=sflag, size = 0x8, scoped, tag = 'scoped memory for tpu_custom_call.1']
    #allocation7 [shape = 'u8[65536]{0}', space=vmem, size = 0x10000, scoped, tag = 'input window, operand 2']
    #allocation8 [shape = 'u8[65536]{0}', space=vmem, size = 0x10000, scoped, tag = 'output window, operand 0']
    %10 = vsyncpa [#allocation3], 0
    %s11 = scalar_lea.sflag [#allocation3], 1
    %12 = vsyncpa %s11, 0
    %13 = vsyncpa [#allocation6], 0
    %s14 = scalar_lea.sflag [#allocation6], 1
    %15 = vsyncpa %s14, 0
    %16 = vsyncpa [#allocation4], 0
    %s17 = scalar_lea.sflag [#allocation4], 1
    %18 = vsyncpa %s17, 0
    loop: start=0, step=1, limit=4
    $region2: #{tpu_custom_call.1} parent=1 // loop_pre_header
      _
    $region3: #{tpu_custom_call.1} parent=1 // loop_header
      %s20 = sphi 0, %s24
      %p21 = scmp.ge.s32.totalorder %s20, 4
      %s30 = sphi 0, %s32
      %s33 = sphi 0, %s30
      %s34 = sphi 0, %s33
      %s50 = sphi 0, %s34
      %s56 = sphi 0, %s58
      %s59 = sphi 0, %s56
      %s60 = sphi 0, %s59
      %s76 = sphi 0, %s60
      %s82 = sphi 0, %s84
      %s85 = sphi 0, %s82
      %s86 = sphi 0, %s85
      %s102 = sphi 0, %s86
      %s108 = sphi 0, %s110
      %s111 = sphi 0, %s108
      %s112 = sphi 0, %s111
      %s128 = sphi 0, %s112
      %s134 = sphi 0, %s136
      %s137 = sphi 0, %s134
      %s138 = sphi 0, %s137
      %s154 = sphi 0, %s138
    $region4: #{tpu_custom_call.1} parent=1 // loop_header_branch
      %23 = sbr.rel (%p21) target = $region8
    $region5: #{tpu_custom_call.1} parent=1 // loop_body
      %s25 = ssub.s32 %s20, 1
      %s26 = ssub.s32 %s20, 2
      %s27 = sadd.s32 %s20, 1
      %s28 = ssub.s32 %s20, %s27
      %p29 = scmp.eq.s32.totalorder %s28, 0
      %s31 = sadd.s32 %s30, 1
      %s32 = scalar_select %p29, %s30, %s31
      %p35 = pneg %p29
      %p36 = scmp.eq.s32.totalorder %s20, 1
      %p37 = por %p35, %p36
      %p38 = scmp.ne.s32.totalorder %s30, %s33
      %p39 = scmp.eq.s32.totalorder %s20, 0
      %p40 = por %p38, %p39
      %p41 = scmp.ne.s32.totalorder %s30, %s33
      %p42 = scmp.eq.s32.totalorder %s25, 1
      %p43 = por %p41, %p42
      %p44 = scmp.ne.s32.totalorder %s33, %s34
      %p45 = scmp.eq.s32.totalorder %s25, 0
      %p46 = por %p44, %p45
      %p47 = scmp.ne.s32.totalorder %s33, %s34
      %p48 = scmp.eq.s32.totalorder %s26, 1
      %p49 = por %p47, %p48
      %p51 = scmp.ne.s32.totalorder %s34, %s50
      %p52 = scmp.eq.s32.totalorder %s26, 0
      %p53 = por %p51, %p52
      %s54 = ssub.s32 %s20, %s27
      %p55 = scmp.eq.s32.totalorder %s54, 0
      %s57 = sadd.s32 %s56, 1
      %s58 = scalar_select %p55, %s56, %s57
      %p61 = pneg %p55
      %p62 = scmp.eq.s32.totalorder %s20, 1
      %p63 = por %p61, %p62
      %p64 = scmp.ne.s32.totalorder %s56, %s59
      %p65 = scmp.eq.s32.totalorder %s20, 0
      %p66 = por %p64, %p65
      %p67 = scmp.ne.s32.totalorder %s56, %s59
      %p68 = scmp.eq.s32.totalorder %s25, 1
      %p69 = por %p67, %p68
      %p70 = scmp.ne.s32.totalorder %s59, %s60
      %p71 = scmp.eq.s32.totalorder %s25, 0
      %p72 = por %p70, %p71
      %p73 = scmp.ne.s32.totalorder %s59, %s60
      %p74 = scmp.eq.s32.totalorder %s26, 1
      %p75 = por %p73, %p74
      %p77 = scmp.ne.s32.totalorder %s60, %s76
      %p78 = scmp.eq.s32.totalorder %s26, 0
      %p79 = por %p77, %p78
      %s80 = ssub.s32 %s20, %s27
      %p81 = scmp.eq.s32.totalorder %s80, 0
      %s83 = sadd.s32 %s82, 1
      %s84 = scalar_select %p81, %s82, %s83
      %p87 = pneg %p81
      %p88 = scmp.eq.s32.totalorder %s20, 1
      %p89 = por %p87, %p88
      %p90 = scmp.ne.s32.totalorder %s82, %s85
      %p91 = scmp.eq.s32.totalorder %s20, 0
      %p92 = por %p90, %p91
      %p93 = scmp.ne.s32.totalorder %s82, %s85
      %p94 = scmp.eq.s32.totalorder %s25, 1
      %p95 = por %p93, %p94
      %p96 = scmp.ne.s32.totalorder %s85, %s86
      %p97 = scmp.eq.s32.totalorder %s25, 0
      %p98 = por %p96, %p97
      %p99 = scmp.ne.s32.totalorder %s85, %s86
      %p100 = scmp.eq.s32.totalorder %s26, 1
      %p101 = por %p99, %p100
      %p103 = scmp.ne.s32.totalorder %s86, %s102
      %p104 = scmp.eq.s32.totalorder %s26, 0
      %p105 = por %p103, %p104
      %s106 = ssub.s32 %s20, %s27
      %p107 = scmp.eq.s32.totalorder %s106, 0
      %s109 = sadd.s32 %s108, 1
      %s110 = scalar_select %p107, %s108, %s109
      %p113 = pneg %p107
      %p114 = scmp.eq.s32.totalorder %s20, 1
      %p115 = por %p113, %p114
      %p116 = scmp.ne.s32.totalorder %s108, %s111
      %p117 = scmp.eq.s32.totalorder %s20, 0
      %p118 = por %p116, %p117
      %p119 = scmp.ne.s32.totalorder %s108, %s111
      %p120 = scmp.eq.s32.totalorder %s25, 1
      %p121 = por %p119, %p120
      %p122 = scmp.ne.s32.totalorder %s111, %s112
      %p123 = scmp.eq.s32.totalorder %s25, 0
      %p124 = por %p122, %p123
      %p125 = scmp.ne.s32.totalorder %s111, %s112
      %p126 = scmp.eq.s32.totalorder %s26, 1
      %p127 = por %p125, %p126
      %p129 = scmp.ne.s32.totalorder %s112, %s128
      %p130 = scmp.eq.s32.totalorder %s26, 0
      %p131 = por %p129, %p130
      %s132 = ssub.s32 %s20, %s27
      %p133 = scmp.eq.s32.totalorder %s132, 0
      %s135 = sadd.s32 %s134, 1
      %s136 = scalar_select %p133, %s134, %s135
      %p139 = pneg %p133
      %p140 = scmp.eq.s32.totalorder %s20, 1
      %p141 = por %p139, %p140
      %p142 = scmp.ne.s32.totalorder %s134, %s137
      %p143 = scmp.eq.s32.totalorder %s20, 0
      %p144 = por %p142, %p143
      %p145 = scmp.ne.s32.totalorder %s134, %s137
      %p146 = scmp.eq.s32.totalorder %s25, 1
      %p147 = por %p145, %p146
      %p148 = scmp.ne.s32.totalorder %s137, %s138
      %p149 = scmp.eq.s32.totalorder %s25, 0
      %p150 = por %p148, %p149
      %p151 = scmp.ne.s32.totalorder %s137, %s138
      %p152 = scmp.eq.s32.totalorder %s26, 1
      %p153 = por %p151, %p152
      %p155 = scmp.ne.s32.totalorder %s138, %s154
      %p156 = scmp.eq.s32.totalorder %s26, 0
      %p157 = por %p155, %p156
      %p158 = scmp.le.s32.totalorder 1, %s20
      %p159 = scmp.lt.s32.totalorder %s20, 3
      %p160 = pnand %p158, %p159
      %p161 = pneg %p160
      // Predicated region
      $region9: #{tpu_custom_call.1} parent=5 // pred_check
        _
      $region10: #{tpu_custom_call.1} parent=5 // pred_check_branch
        %163 = sbr.rel (%p160) target = $region12
      $region11: #{tpu_custom_call.1} parent=5 // pred_region
        %s164 = ssub.s32 %s20, 1
      $region12: #{tpu_custom_call.1} parent=5 // pred_fallthru
        _
      %p165 = scmp.lt.s32.totalorder %s20, 2
      // Predicated region
      $region13: #{tpu_custom_call.1} parent=5 // pred_check
        %p166 = pneg %p165
      $region14: #{tpu_custom_call.1} parent=5 // pred_check_branch
        %168 = sbr.rel (%p166) target = $region16
      $region15: #{tpu_custom_call.1} parent=5 // pred_region
        // Predicated region
        $region17: #{tpu_custom_call.1} parent=15 // pred_check
          %p169 = pneg %p40
        $region18: #{tpu_custom_call.1} parent=15 // pred_check_branch
          %171 = sbr.rel (%p169) target = $region20
        $region19: #{tpu_custom_call.1} parent=15 // pred_region
          %s172 = sand.u32 %s30, 1
          %s173 = scalar_lea.sflag [#allocation3], %s172
          %s174 = sand.u32 %s30, 1
          %s175 = smul.addr %s174, 64
          %s176 = scalar_lea.vmem [#allocation2], %s175
          %s177 = smul.u32 8, %s20
          %s179 = ssub.s32 1024, 1024
          %180 = vsyncadd %s173, %s179
          %s181 = smul.addr %s177, 128
          %s182 = scalar_lea.hbm %s0, %s181
          %s183 = sshll.u32 %s176, 4
          %s184 = int_to_ptr.vmem [resolvable:$true] %s183
          %189 = dma.hbm_to_vmem [thread:$0]  %s182, 1024, %s184, %s173, 128, 128, 8
        $region20: #{tpu_custom_call.1} parent=15 // pred_fallthru
          _
        // Predicated region
        $region21: #{tpu_custom_call.1} parent=15 // pred_check
          %p190 = pneg %p66
        $region22: #{tpu_custom_call.1} parent=15 // pred_check_branch
          %192 = sbr.rel (%p190) target = $region24
        $region23: #{tpu_custom_call.1} parent=15 // pred_region
          %s193 = sand.u32 %s20, 1
          %s194 = scalar_lea.sflag [#allocation6], %s193
          %s195 = sand.u32 %s56, 1
          %s196 = smul.addr %s195, 64
          %s197 = scalar_lea.vmem [#allocation5], %s196
          %s198 = smul.u32 8, %s20
          %s200 = ssub.s32 1024, 1024
          %201 = vsyncadd %s194, %s200
          %s202 = smul.addr %s198, 128
          %s203 = scalar_lea.hbm %s1, %s202
          %s204 = sshll.u32 %s197, 4
          %s205 = int_to_ptr.vmem [resolvable:$true] %s204
          %210 = dma.hbm_to_vmem [thread:$0]  %s203, 1024, %s205, %s194, 128, 128, 8
        $region24: #{tpu_custom_call.1} parent=15 // pred_fallthru
          _
        // Predicated region
        $region25: #{tpu_custom_call.1} parent=15 // pred_check
          %p211 = pneg %p92
        $region26: #{tpu_custom_call.1} parent=15 // pred_check_branch
          %213 = sbr.rel (%p211) target = $region28
        $region27: #{tpu_custom_call.1} parent=15 // pred_region
          %s214 = sand.u32 %s20, 1
          %s215 = scalar_lea.sflag [#allocation6], %s214
          %s216 = sand.u32 %s82, 1
          %s217 = smul.addr %s216, 64
          %s218 = scalar_lea.vmem [#allocation7], %s217
          %s219 = smul.u32 8, %s20
          %s221 = ssub.s32 1024, 1024
          %222 = vsyncadd %s215, %s221
          %s223 = smul.addr %s219, 128
          %s224 = scalar_lea.hbm %s2, %s223
          %s225 = sshll.u32 %s218, 4
          %s226 = int_to_ptr.vmem [resolvable:$true] %s225
          %231 = dma.hbm_to_vmem [thread:$0]  %s224, 1024, %s226, %s215, 128, 128, 8
        $region28: #{tpu_custom_call.1} parent=15 // pred_fallthru
          _
      $region16: #{tpu_custom_call.1} parent=5 // pred_fallthru
        _
      %p232 = scmp.le.s32.totalorder 1, %s20
      %p233 = scmp.lt.s32.totalorder %s20, 3
      %p234 = pnand %p232, %p233
      %p235 = pneg %p234
      // Predicated region
      $region29: #{tpu_custom_call.1} parent=5 // pred_check
        _
      $region30: #{tpu_custom_call.1} parent=5 // pred_check_branch
        %237 = sbr.rel (%p234) target = $region32
      $region31: #{tpu_custom_call.1} parent=5 // pred_region
        %s238 = ssub.s32 %s20, 1
        %s239 = sand.u32 %s33, 1
        %s240 = scalar_lea.sflag [#allocation3], %s239
        %s241 = sand.u32 %s33, 1
        %s242 = smul.addr %s241, 64
        %s243 = scalar_lea.vmem [#allocation2], %s242
        // Predicated region
        $region33: #{tpu_custom_call.1} parent=31 // pred_check
          %p244 = pneg %p46
        $region34: #{tpu_custom_call.1} parent=31 // pred_check_branch
          %246 = sbr.rel (%p244) target = $region36
        $region35: #{tpu_custom_call.1} parent=31 // pred_region
          %247 = dma.done %s240, 1024
        $region36: #{tpu_custom_call.1} parent=31 // pred_fallthru
          _
        %s248 = sand.u32 %s25, 1
        %s249 = scalar_lea.sflag [#allocation6], %s248
        %s250 = sand.u32 %s59, 1
        %s251 = smul.addr %s250, 64
        %s252 = scalar_lea.vmem [#allocation5], %s251
        // Predicated region
        $region37: #{tpu_custom_call.1} parent=31 // pred_check
          %p253 = pneg %p72
        $region38: #{tpu_custom_call.1} parent=31 // pred_check_branch
          %255 = sbr.rel (%p253) target = $region40
        $region39: #{tpu_custom_call.1} parent=31 // pred_region
          %256 = dma.done %s249, 1024
        $region40: #{tpu_custom_call.1} parent=31 // pred_fallthru
          _
        %s257 = sand.u32 %s25, 1
        %s258 = scalar_lea.sflag [#allocation6], %s257
        %s259 = sand.u32 %s85, 1
        %s260 = smul.addr %s259, 64
        %s261 = scalar_lea.vmem [#allocation7], %s260
        // Predicated region
        $region41: #{tpu_custom_call.1} parent=31 // pred_check
          %p262 = pneg %p98
        $region42: #{tpu_custom_call.1} parent=31 // pred_check_branch
          %264 = sbr.rel (%p262) target = $region44
        $region43: #{tpu_custom_call.1} parent=31 // pred_region
          %265 = dma.done %s258, 1024
        $region44: #{tpu_custom_call.1} parent=31 // pred_fallthru
          _
        %s266 = sand.u32 %s33, 1
        %s267 = scalar_lea.sflag [#allocation3], %s266
        %s268 = sand.u32 %s33, 1
        %s269 = smul.addr %s268, 64
        %s270 = scalar_lea.vmem [#allocation2], %s269
        %p271 = pneg %p46
        %p272 = pneg %p43
        %s273 = sand.u32 %s25, 1
        %s274 = scalar_lea.sflag [#allocation6], %s273
        %s275 = sand.u32 %s59, 1
        %s276 = smul.addr %s275, 64
        %s277 = scalar_lea.vmem [#allocation5], %s276
        %p278 = pneg %p72
        %p279 = pneg %p69
        %s280 = sand.u32 %s25, 1
        %s281 = scalar_lea.sflag [#allocation6], %s280
        %s282 = sand.u32 %s85, 1
        %s283 = smul.addr %s282, 64
        %s284 = scalar_lea.vmem [#allocation7], %s283
        %p285 = pneg %p98
        %p286 = pneg %p95
        %p287 = pneg %p124
        %p288 = pneg %p121
        %s289 = sand.u32 %s111, 1
        %s290 = scalar_lea.sflag [#allocation4], %s289
        %s291 = sand.u32 %s111, 1
        %s292 = smul.addr %s291, 64
        %s293 = scalar_lea.vmem [#allocation8], %s292
        %p294 = pneg %p150
        %p295 = pneg %p147
        %s296 = smul.u32 8, %s25
        %p297 = scmp.lt.s32.totalorder %s296, 15
        %s298 = scalar_select %p297, %s296, 15
        %s299 = smul.addr %s298, 8
        %s300 = scalar_lea.vmem %s4, %s299
        %s301 = smul.u32 8, %s25
        %s302 = smul.u32 8, %s25
        %s303 = smul.u32 8, %s25
        %s304 = smul.u32 8, %s25
        %s305 = smul.u32 8, %s25
        %p306 = scmp.lt.s32.totalorder %s305, 15
        %s307 = scalar_select %p306, %s305, 15
        %s308 = smul.addr %s307, 8
        %s309 = scalar_lea.vmem %s4, %s308
        %s310 = smul.u32 8, %s25
        %v311 = vld [vmem:[%s243] sm:$0xff]
        %v312 = vld [vmem:[%s243 + $0x8] sm:$0xff]
        %v313 = vld [vmem:[%s243 + $0x10] sm:$0xff]
        %v314 = vld [vmem:[%s243 + $0x18] sm:$0xff]
        %v315 = vld [vmem:[%s243 + $0x20] sm:$0xff]
        %v316 = vld [vmem:[%s243 + $0x28] sm:$0xff]
        %v317 = vld [vmem:[%s243 + $0x30] sm:$0xff]
        %v318 = vld [vmem:[%s243 + $0x38] sm:$0xff]
        %v319 = vld [vmem:[%s252] sm:$0xff]
        %v320 = vld [vmem:[%s252 + $0x8] sm:$0xff]
        %v321 = vld [vmem:[%s252 + $0x10] sm:$0xff]
        %v322 = vld [vmem:[%s252 + $0x18] sm:$0xff]
        %v323 = vld [vmem:[%s252 + $0x20] sm:$0xff]
        %v324 = vld [vmem:[%s252 + $0x28] sm:$0xff]
        %v325 = vld [vmem:[%s252 + $0x30] sm:$0xff]
        %v326 = vld [vmem:[%s252 + $0x38] sm:$0xff]
        %v327 = vld [vmem:[%s261] sm:$0xff]
        %v328 = vld [vmem:[%s261 + $0x8] sm:$0xff]
        %v329 = vld [vmem:[%s261 + $0x10] sm:$0xff]
        %v330 = vld [vmem:[%s261 + $0x18] sm:$0xff]
        %v331 = vld [vmem:[%s261 + $0x20] sm:$0xff]
        %v332 = vld [vmem:[%s261 + $0x28] sm:$0xff]
        %v333 = vld [vmem:[%s261 + $0x30] sm:$0xff]
        %v334 = vld [vmem:[%s261 + $0x38] sm:$0xff]
        %vm335 = vcmask 130048
        %v337 = vsel %vm335, %v311, 0
        %v340 = vsel %vm335, %v319, 0
        %342 = vmatprep.subr.mxu0 0.0
        %343 = vmatpush1.xpose.msra.mxu0 0.0
        %344 = vmatprep.subr.mxu0 0.0
        %345 = vmatpush1.xpose.msra.mxu0 0.0
        %346 = vmatprep.subr.mxu0 0.0
        %347 = vmatpush1.xpose.msra.mxu0 0.0
        %348 = vmatprep.subr.mxu0 0.0
        %349 = vmatpush1.xpose.msra.mxu0 0.0
        %350 = vmatprep.subr.mxu0 0.0
        %351 = vmatpush1.xpose.msra.mxu0 0.0
        %352 = vmatprep.subr.mxu0 0.0
        %353 = vmatpush1.xpose.msra.mxu0 0.0
        %354 = vmatprep.subr.mxu0 0.0
        %355 = vmatpush1.xpose.msra.mxu0 0.0
        %356 = vmatprep.subr.mxu0 0.0
        %357 = vmatpush1.xpose.msra.mxu0 0.0
        %358 = vmatprep.subr.mxu0 0.0
        %359 = vmatpush1.xpose.msra.mxu0 0.0
        %360 = vmatprep.subr.mxu0 0.0
        %361 = vmatpush1.xpose.msra.mxu0 0.0
        %362 = vmatprep.subr.mxu0 0.0
        %363 = vmatpush1.xpose.msra.mxu0 0.0
        %364 = vmatprep.subr.mxu0 0.0
        %365 = vmatpush1.xpose.msra.mxu0 0.0
        %366 = vmatprep.subr.mxu0 0.0
        %367 = vmatpush1.xpose.msra.mxu0 0.0
        %368 = vmatprep.subr.mxu0 0.0
        %369 = vmatpush1.xpose.msra.mxu0 0.0
        %370 = vmatprep.subr.mxu0 0.0
        %371 = vmatpush1.xpose.msra.mxu0 0.0
        %372 = vmatprep.subr.mxu0 0.0
        %373 = vmatpush1.xpose.msra.mxu0 %v340
        %374 = vmatprep.subr.mxu0 0.0
        %375 = vmatpush2.xpose.msra.mxu0 0.0
        %376 = vmatprep.subr.mxu0 0.0
        %377 = vmatpush2.xpose.msra.mxu0 0.0
        %378 = vmatprep.subr.mxu0 0.0
        %379 = vmatpush2.xpose.msra.mxu0 0.0
        %380 = vmatprep.subr.mxu0 0.0
        %381 = vmatpush2.xpose.msra.mxu0 0.0
        %382 = vmatprep.subr.mxu0 0.0
        %383 = vmatpush2.xpose.msra.mxu0 0.0
        %384 = vmatprep.subr.mxu0 0.0
        %385 = vmatpush2.xpose.msra.mxu0 0.0
        %386 = vmatprep.subr.mxu0 0.0
        %387 = vmatpush2.xpose.msra.mxu0 0.0
        %388 = vmatprep.subr.mxu0 0.0
        %389 = vmatpush2.xpose.msra.mxu0 0.0
        %390 = vmatprep.subr.mxu0 0.0
        %391 = vmatpush2.xpose.msra.mxu0 0.0
        %392 = vmatprep.subr.mxu0 0.0
        %393 = vmatpush2.xpose.msra.mxu0 0.0
        %394 = vmatprep.subr.mxu0 0.0
        %395 = vmatpush2.xpose.msra.mxu0 0.0
        %396 = vmatprep.subr.mxu0 0.0
        %397 = vmatpush2.xpose.msra.mxu0 0.0
        %398 = vmatprep.subr.mxu0 0.0
        %399 = vmatpush2.xpose.msra.mxu0 0.0
        %400 = vmatprep.subr.mxu0 0.0
        %401 = vmatpush2.xpose.msra.mxu0 0.0
        %402 = vmatprep.subr.mxu0 0.0
        %403 = vmatpush2.xpose.msra.mxu0 0.0
        %404 = vmatprep.subr.mxu0 0.0
        %405 = vmatpush2.xpose.msra.mxu0 0.0
        %406 = vmatprep.mubr.f32.mxu0 0.0
        %407 = vmatmul.mubr.f32.gmra.mxu0 %v337
        %v408 = vpop.f32.mrf.mxu0
        %v409 = vadd.f32 0.0, %v408
        %v410 = vpop.f32.mrf.mxu0
        %411 = vdwg.mxu0
        %v413 = vsel %vm335, %v312, 0
        %v416 = vsel %vm335, %v320, 0
        %418 = vmatprep.subr.mxu0 0.0
        %419 = vmatpush1.xpose.msra.mxu0 0.0
        %420 = vmatprep.subr.mxu0 0.0
        %421 = vmatpush1.xpose.msra.mxu0 0.0
        %422 = vmatprep.subr.mxu0 0.0
        %423 = vmatpush1.xpose.msra.mxu0 0.0
        %424 = vmatprep.subr.mxu0 0.0
        %425 = vmatpush1.xpose.msra.mxu0 0.0
        %426 = vmatprep.subr.mxu0 0.0
        %427 = vmatpush1.xpose.msra.mxu0 0.0
        %428 = vmatprep.subr.mxu0 0.0
        %429 = vmatpush1.xpose.msra.mxu0 0.0
        %430 = vmatprep.subr.mxu0 0.0
        %431 = vmatpush1.xpose.msra.mxu0 0.0
        %432 = vmatprep.subr.mxu0 0.0
        %433 = vmatpush1.xpose.msra.mxu0 0.0
        %434 = vmatprep.subr.mxu0 0.0
        %435 = vmatpush1.xpose.msra.mxu0 0.0
        %436 = vmatprep.subr.mxu0 0.0
        %437 = vmatpush1.xpose.msra.mxu0 0.0
        %438 = vmatprep.subr.mxu0 0.0
        %439 = vmatpush1.xpose.msra.mxu0 0.0
        %440 = vmatprep.subr.mxu0 0.0
        %441 = vmatpush1.xpose.msra.mxu0 0.0
        %442 = vmatprep.subr.mxu0 0.0
        %443 = vmatpush1.xpose.msra.mxu0 0.0
        %444 = vmatprep.subr.mxu0 0.0
        %445 = vmatpush1.xpose.msra.mxu0 0.0
        %446 = vmatprep.subr.mxu0 0.0
        %447 = vmatpush1.xpose.msra.mxu0 0.0
        %448 = vmatprep.subr.mxu0 0.0
        %449 = vmatpush1.xpose.msra.mxu0 %v416
        %450 = vmatprep.subr.mxu0 0.0
        %451 = vmatpush2.xpose.msra.mxu0 0.0
        %452 = vmatprep.subr.mxu0 0.0
        %453 = vmatpush2.xpose.msra.mxu0 0.0
        %454 = vmatprep.subr.mxu0 0.0
        %455 = vmatpush2.xpose.msra.mxu0 0.0
        %456 = vmatprep.subr.mxu0 0.0
        %457 = vmatpush2.xpose.msra.mxu0 0.0
        %458 = vmatprep.subr.mxu0 0.0
        %459 = vmatpush2.xpose.msra.mxu0 0.0
        %460 = vmatprep.subr.mxu0 0.0
        %461 = vmatpush2.xpose.msra.mxu0 0.0
        %462 = vmatprep.subr.mxu0 0.0
        %463 = vmatpush2.xpose.msra.mxu0 0.0
        %464 = vmatprep.subr.mxu0 0.0
        %465 = vmatpush2.xpose.msra.mxu0 0.0
        %466 = vmatprep.subr.mxu0 0.0
        %467 = vmatpush2.xpose.msra.mxu0 0.0
        %468 = vmatprep.subr.mxu0 0.0
        %469 = vmatpush2.xpose.msra.mxu0 0.0
        %470 = vmatprep.subr.mxu0 0.0
        %471 = vmatpush2.xpose.msra.mxu0 0.0
        %472 = vmatprep.subr.mxu0 0.0
        %473 = vmatpush2.xpose.msra.mxu0 0.0
        %474 = vmatprep.subr.mxu0 0.0
        %475 = vmatpush2.xpose.msra.mxu0 0.0
        %476 = vmatprep.subr.mxu0 0.0
        %477 = vmatpush2.xpose.msra.mxu0 0.0
        %478 = vmatprep.subr.mxu0 0.0
        %479 = vmatpush2.xpose.msra.mxu0 0.0
        %480 = vmatprep.subr.mxu0 0.0
        %481 = vmatpush2.xpose.msra.mxu0 0.0
        %482 = vmatprep.mubr.f32.mxu0 0.0
        %483 = vmatmul.mubr.f32.gmra.mxu0 %v413
        %v484 = vpop.f32.mrf.mxu0
        %v485 = vadd.f32 0.0, %v484
        %v486 = vpop.f32.mrf.mxu0
        %487 = vdwg.mxu0
        %v489 = vsel %vm335, %v313, 0
        %v492 = vsel %vm335, %v321, 0
        %494 = vmatprep.subr.mxu0 0.0
        %495 = vmatpush1.xpose.msra.mxu0 0.0
        %496 = vmatprep.subr.mxu0 0.0
        %497 = vmatpush1.xpose.msra.mxu0 0.0
        %498 = vmatprep.subr.mxu0 0.0
        %499 = vmatpush1.xpose.msra.mxu0 0.0
        %500 = vmatprep.subr.mxu0 0.0
        %501 = vmatpush1.xpose.msra.mxu0 0.0
        %502 = vmatprep.subr.mxu0 0.0
        %503 = vmatpush1.xpose.msra.mxu0 0.0
        %504 = vmatprep.subr.mxu0 0.0
        %505 = vmatpush1.xpose.msra.mxu0 0.0
        %506 = vmatprep.subr.mxu0 0.0
        %507 = vmatpush1.xpose.msra.mxu0 0.0
        %508 = vmatprep.subr.mxu0 0.0
        %509 = vmatpush1.xpose.msra.mxu0 0.0
        %510 = vmatprep.subr.mxu0 0.0
        %511 = vmatpush1.xpose.msra.mxu0 0.0
        %512 = vmatprep.subr.mxu0 0.0
        %513 = vmatpush1.xpose.msra.mxu0 0.0
        %514 = vmatprep.subr.mxu0 0.0
        %515 = vmatpush1.xpose.msra.mxu0 0.0
        %516 = vmatprep.subr.mxu0 0.0
        %517 = vmatpush1.xpose.msra.mxu0 0.0
        %518 = vmatprep.subr.mxu0 0.0
        %519 = vmatpush1.xpose.msra.mxu0 0.0
        %520 = vmatprep.subr.mxu0 0.0
        %521 = vmatpush1.xpose.msra.mxu0 0.0
        %522 = vmatprep.subr.mxu0 0.0
        %523 = vmatpush1.xpose.msra.mxu0 0.0
        %524 = vmatprep.subr.mxu0 0.0
        %525 = vmatpush1.xpose.msra.mxu0 %v492
        %526 = vmatprep.subr.mxu0 0.0
        %527 = vmatpush2.xpose.msra.mxu0 0.0
        %528 = vmatprep.subr.mxu0 0.0
        %529 = vmatpush2.xpose.msra.mxu0 0.0
        %530 = vmatprep.subr.mxu0 0.0
        %531 = vmatpush2.xpose.msra.mxu0 0.0
        %532 = vmatprep.subr.mxu0 0.0
        %533 = vmatpush2.xpose.msra.mxu0 0.0
        %534 = vmatprep.subr.mxu0 0.0
        %535 = vmatpush2.xpose.msra.mxu0 0.0
        %536 = vmatprep.subr.mxu0 0.0
        %537 = vmatpush2.xpose.msra.mxu0 0.0
        %538 = vmatprep.subr.mxu0 0.0
        %539 = vmatpush2.xpose.msra.mxu0 0.0
        %540 = vmatprep.subr.mxu0 0.0
        %541 = vmatpush2.xpose.msra.mxu0 0.0
        %542 = vmatprep.subr.mxu0 0.0
        %543 = vmatpush2.xpose.msra.mxu0 0.0
        %544 = vmatprep.subr.mxu0 0.0
        %545 = vmatpush2.xpose.msra.mxu0 0.0
        %546 = vmatprep.subr.mxu0 0.0
        %547 = vmatpush2.xpose.msra.mxu0 0.0
        %548 = vmatprep.subr.mxu0 0.0
        %549 = vmatpush2.xpose.msra.mxu0 0.0
        %550 = vmatprep.subr.mxu0 0.0
        %551 = vmatpush2.xpose.msra.mxu0 0.0
        %552 = vmatprep.subr.mxu0 0.0
        %553 = vmatpush2.xpose.msra.mxu0 0.0
        %554 = vmatprep.subr.mxu0 0.0
        %555 = vmatpush2.xpose.msra.mxu0 0.0
        %556 = vmatprep.subr.mxu0 0.0
        %557 = vmatpush2.xpose.msra.mxu0 0.0
        %558 = vmatprep.mubr.f32.mxu0 0.0
        %559 = vmatmul.mubr.f32.gmra.mxu0 %v489
        %v560 = vpop.f32.mrf.mxu0
        %v561 = vadd.f32 0.0, %v560
        %v562 = vpop.f32.mrf.mxu0
        %563 = vdwg.mxu0
        %v565 = vsel %vm335, %v314, 0
        %v568 = vsel %vm335, %v322, 0
        %570 = vmatprep.subr.mxu0 0.0
        %571 = vmatpush1.xpose.msra.mxu0 0.0
        %572 = vmatprep.subr.mxu0 0.0
        %573 = vmatpush1.xpose.msra.mxu0 0.0
        %574 = vmatprep.subr.mxu0 0.0
        %575 = vmatpush1.xpose.msra.mxu0 0.0
        %576 = vmatprep.subr.mxu0 0.0
        %577 = vmatpush1.xpose.msra.mxu0 0.0
        %578 = vmatprep.subr.mxu0 0.0
        %579 = vmatpush1.xpose.msra.mxu0 0.0
        %580 = vmatprep.subr.mxu0 0.0
        %581 = vmatpush1.xpose.msra.mxu0 0.0
        %582 = vmatprep.subr.mxu0 0.0
        %583 = vmatpush1.xpose.msra.mxu0 0.0
        %584 = vmatprep.subr.mxu0 0.0
        %585 = vmatpush1.xpose.msra.mxu0 0.0
        %586 = vmatprep.subr.mxu0 0.0
        %587 = vmatpush1.xpose.msra.mxu0 0.0
        %588 = vmatprep.subr.mxu0 0.0
        %589 = vmatpush1.xpose.msra.mxu0 0.0
        %590 = vmatprep.subr.mxu0 0.0
        %591 = vmatpush1.xpose.msra.mxu0 0.0
        %592 = vmatprep.subr.mxu0 0.0
        %593 = vmatpush1.xpose.msra.mxu0 0.0
        %594 = vmatprep.subr.mxu0 0.0
        %595 = vmatpush1.xpose.msra.mxu0 0.0
        %596 = vmatprep.subr.mxu0 0.0
        %597 = vmatpush1.xpose.msra.mxu0 0.0
        %598 = vmatprep.subr.mxu0 0.0
        %599 = vmatpush1.xpose.msra.mxu0 0.0
        %600 = vmatprep.subr.mxu0 0.0
        %601 = vmatpush1.xpose.msra.mxu0 %v568
        %602 = vmatprep.subr.mxu0 0.0
        %603 = vmatpush2.xpose.msra.mxu0 0.0
        %604 = vmatprep.subr.mxu0 0.0
        %605 = vmatpush2.xpose.msra.mxu0 0.0
        %606 = vmatprep.subr.mxu0 0.0
        %607 = vmatpush2.xpose.msra.mxu0 0.0
        %608 = vmatprep.subr.mxu0 0.0
        %609 = vmatpush2.xpose.msra.mxu0 0.0
        %610 = vmatprep.subr.mxu0 0.0
        %611 = vmatpush2.xpose.msra.mxu0 0.0
        %612 = vmatprep.subr.mxu0 0.0
        %613 = vmatpush2.xpose.msra.mxu0 0.0
        %614 = vmatprep.subr.mxu0 0.0
        %615 = vmatpush2.xpose.msra.mxu0 0.0
        %616 = vmatprep.subr.mxu0 0.0
        %617 = vmatpush2.xpose.msra.mxu0 0.0
        %618 = vmatprep.subr.mxu0 0.0
        %619 = vmatpush2.xpose.msra.mxu0 0.0
        %620 = vmatprep.subr.mxu0 0.0
        %621 = vmatpush2.xpose.msra.mxu0 0.0
        %622 = vmatprep.subr.mxu0 0.0
        %623 = vmatpush2.xpose.msra.mxu0 0.0
        %624 = vmatprep.subr.mxu0 0.0
        %625 = vmatpush2.xpose.msra.mxu0 0.0
        %626 = vmatprep.subr.mxu0 0.0
        %627 = vmatpush2.xpose.msra.mxu0 0.0
        %628 = vmatprep.subr.mxu0 0.0
        %629 = vmatpush2.xpose.msra.mxu0 0.0
        %630 = vmatprep.subr.mxu0 0.0
        %631 = vmatpush2.xpose.msra.mxu0 0.0
        %632 = vmatprep.subr.mxu0 0.0
        %633 = vmatpush2.xpose.msra.mxu0 0.0
        %634 = vmatprep.mubr.f32.mxu0 0.0
        %635 = vmatmul.mubr.f32.gmra.mxu0 %v565
        %v636 = vpop.f32.mrf.mxu0
        %v637 = vadd.f32 0.0, %v636
        %v638 = vpop.f32.mrf.mxu0
        %639 = vdwg.mxu0
        %v641 = vsel %vm335, %v315, 0
        %v644 = vsel %vm335, %v323, 0
        %646 = vmatprep.subr.mxu0 0.0
        %647 = vmatpush1.xpose.msra.mxu0 0.0
        %648 = vmatprep.subr.mxu0 0.0
        %649 = vmatpush1.xpose.msra.mxu0 0.0
        %650 = vmatprep.subr.mxu0 0.0
        %651 = vmatpush1.xpose.msra.mxu0 0.0
        %652 = vmatprep.subr.mxu0 0.0
        %653 = vmatpush1.xpose.msra.mxu0 0.0
        %654 = vmatprep.subr.mxu0 0.0
        %655 = vmatpush1.xpose.msra.mxu0 0.0
        %656 = vmatprep.subr.mxu0 0.0
        %657 = vmatpush1.xpose.msra.mxu0 0.0
        %658 = vmatprep.subr.mxu0 0.0
        %659 = vmatpush1.xpose.msra.mxu0 0.0
        %660 = vmatprep.subr.mxu0 0.0
        %661 = vmatpush1.xpose.msra.mxu0 0.0
        %662 = vmatprep.subr.mxu0 0.0
        %663 = vmatpush1.xpose.msra.mxu0 0.0
        %664 = vmatprep.subr.mxu0 0.0
        %665 = vmatpush1.xpose.msra.mxu0 0.0
        %666 = vmatprep.subr.mxu0 0.0
        %667 = vmatpush1.xpose.msra.mxu0 0.0
        %668 = vmatprep.subr.mxu0 0.0
        %669 = vmatpush1.xpose.msra.mxu0 0.0
        %670 = vmatprep.subr.mxu0 0.0
        %671 = vmatpush1.xpose.msra.mxu0 0.0
        %672 = vmatprep.subr.mxu0 0.0
        %673 = vmatpush1.xpose.msra.mxu0 0.0
        %674 = vmatprep.subr.mxu0 0.0
        %675 = vmatpush1.xpose.msra.mxu0 0.0
        %676 = vmatprep.subr.mxu0 0.0
        %677 = vmatpush1.xpose.msra.mxu0 %v644
        %678 = vmatprep.subr.mxu0 0.0
        %679 = vmatpush2.xpose.msra.mxu0 0.0
        %680 = vmatprep.subr.mxu0 0.0
        %681 = vmatpush2.xpose.msra.mxu0 0.0
        %682 = vmatprep.subr.mxu0 0.0
        %683 = vmatpush2.xpose.msra.mxu0 0.0
        %684 = vmatprep.subr.mxu0 0.0
        %685 = vmatpush2.xpose.msra.mxu0 0.0
        %686 = vmatprep.subr.mxu0 0.0
        %687 = vmatpush2.xpose.msra.mxu0 0.0
        %688 = vmatprep.subr.mxu0 0.0
        %689 = vmatpush2.xpose.msra.mxu0 0.0
        %690 = vmatprep.subr.mxu0 0.0
        %691 = vmatpush2.xpose.msra.mxu0 0.0
        %692 = vmatprep.subr.mxu0 0.0
        %693 = vmatpush2.xpose.msra.mxu0 0.0
        %694 = vmatprep.subr.mxu0 0.0
        %695 = vmatpush2.xpose.msra.mxu0 0.0
        %696 = vmatprep.subr.mxu0 0.0
        %697 = vmatpush2.xpose.msra.mxu0 0.0
        %698 = vmatprep.subr.mxu0 0.0
        %699 = vmatpush2.xpose.msra.mxu0 0.0
        %700 = vmatprep.subr.mxu0 0.0
        %701 = vmatpush2.xpose.msra.mxu0 0.0
        %702 = vmatprep.subr.mxu0 0.0
        %703 = vmatpush2.xpose.msra.mxu0 0.0
        %704 = vmatprep.subr.mxu0 0.0
        %705 = vmatpush2.xpose.msra.mxu0 0.0
        %706 = vmatprep.subr.mxu0 0.0
        %707 = vmatpush2.xpose.msra.mxu0 0.0
        %708 = vmatprep.subr.mxu0 0.0
        %709 = vmatpush2.xpose.msra.mxu0 0.0
        %710 = vmatprep.mubr.f32.mxu0 0.0
        %711 = vmatmul.mubr.f32.gmra.mxu0 %v641
        %v712 = vpop.f32.mrf.mxu0
        %v713 = vadd.f32 0.0, %v712
        %v714 = vpop.f32.mrf.mxu0
        %715 = vdwg.mxu0
        %v717 = vsel %vm335, %v316, 0
        %v720 = vsel %vm335, %v324, 0
        %722 = vmatprep.subr.mxu0 0.0
        %723 = vmatpush1.xpose.msra.mxu0 0.0
        %724 = vmatprep.subr.mxu0 0.0
        %725 = vmatpush1.xpose.msra.mxu0 0.0
        %726 = vmatprep.subr.mxu0 0.0
        %727 = vmatpush1.xpose.msra.mxu0 0.0
        %728 = vmatprep.subr.mxu0 0.0
        %729 = vmatpush1.xpose.msra.mxu0 0.0
        %730 = vmatprep.subr.mxu0 0.0
        %731 = vmatpush1.xpose.msra.mxu0 0.0
        %732 = vmatprep.subr.mxu0 0.0
        %733 = vmatpush1.xpose.msra.mxu0 0.0
        %734 = vmatprep.subr.mxu0 0.0
        %735 = vmatpush1.xpose.msra.mxu0 0.0
        %736 = vmatprep.subr.mxu0 0.0
        %737 = vmatpush1.xpose.msra.mxu0 0.0
        %738 = vmatprep.subr.mxu0 0.0
        %739 = vmatpush1.xpose.msra.mxu0 0.0
        %740 = vmatprep.subr.mxu0 0.0
        %741 = vmatpush1.xpose.msra.mxu0 0.0
        %742 = vmatprep.subr.mxu0 0.0
        %743 = vmatpush1.xpose.msra.mxu0 0.0
        %744 = vmatprep.subr.mxu0 0.0
        %745 = vmatpush1.xpose.msra.mxu0 0.0
        %746 = vmatprep.subr.mxu0 0.0
        %747 = vmatpush1.xpose.msra.mxu0 0.0
        %748 = vmatprep.subr.mxu0 0.0
        %749 = vmatpush1.xpose.msra.mxu0 0.0
        %750 = vmatprep.subr.mxu0 0.0
        %751 = vmatpush1.xpose.msra.mxu0 0.0
        %752 = vmatprep.subr.mxu0 0.0
        %753 = vmatpush1.xpose.msra.mxu0 %v720
        %754 = vmatprep.subr.mxu0 0.0
        %755 = vmatpush2.xpose.msra.mxu0 0.0
        %756 = vmatprep.subr.mxu0 0.0
        %757 = vmatpush2.xpose.msra.mxu0 0.0
        %758 = vmatprep.subr.mxu0 0.0
        %759 = vmatpush2.xpose.msra.mxu0 0.0
        %760 = vmatprep.subr.mxu0 0.0
        %761 = vmatpush2.xpose.msra.mxu0 0.0
        %762 = vmatprep.subr.mxu0 0.0
        %763 = vmatpush2.xpose.msra.mxu0 0.0
        %764 = vmatprep.subr.mxu0 0.0
        %765 = vmatpush2.xpose.msra.mxu0 0.0
        %766 = vmatprep.subr.mxu0 0.0
        %767 = vmatpush2.xpose.msra.mxu0 0.0
        %768 = vmatprep.subr.mxu0 0.0
        %769 = vmatpush2.xpose.msra.mxu0 0.0
        %770 = vmatprep.subr.mxu0 0.0
        %771 = vmatpush2.xpose.msra.mxu0 0.0
        %772 = vmatprep.subr.mxu0 0.0
        %773 = vmatpush2.xpose.msra.mxu0 0.0
        %774 = vmatprep.subr.mxu0 0.0
        %775 = vmatpush2.xpose.msra.mxu0 0.0
        %776 = vmatprep.subr.mxu0 0.0
        %777 = vmatpush2.xpose.msra.mxu0 0.0
        %778 = vmatprep.subr.mxu0 0.0
        %779 = vmatpush2.xpose.msra.mxu0 0.0
        %780 = vmatprep.subr.mxu0 0.0
        %781 = vmatpush2.xpose.msra.mxu0 0.0
        %782 = vmatprep.subr.mxu0 0.0
        %783 = vmatpush2.xpose.msra.mxu0 0.0
        %784 = vmatprep.subr.mxu0 0.0
        %785 = vmatpush2.xpose.msra.mxu0 0.0
        %786 = vmatprep.mubr.f32.mxu0 0.0
        %787 = vmatmul.mubr.f32.gmra.mxu0 %v717
        %v788 = vpop.f32.mrf.mxu0
        %v789 = vadd.f32 0.0, %v788
        %v790 = vpop.f32.mrf.mxu0
        %791 = vdwg.mxu0
        %v793 = vsel %vm335, %v317, 0
        %v796 = vsel %vm335, %v325, 0
        %798 = vmatprep.subr.mxu0 0.0
        %799 = vmatpush1.xpose.msra.mxu0 0.0
        %800 = vmatprep.subr.mxu0 0.0
        %801 = vmatpush1.xpose.msra.mxu0 0.0
        %802 = vmatprep.subr.mxu0 0.0
        %803 = vmatpush1.xpose.msra.mxu0 0.0
        %804 = vmatprep.subr.mxu0 0.0
        %805 = vmatpush1.xpose.msra.mxu0 0.0
        %806 = vmatprep.subr.mxu0 0.0
        %807 = vmatpush1.xpose.msra.mxu0 0.0
        %808 = vmatprep.subr.mxu0 0.0
        %809 = vmatpush1.xpose.msra.mxu0 0.0
        %810 = vmatprep.subr.mxu0 0.0
        %811 = vmatpush1.xpose.msra.mxu0 0.0
        %812 = vmatprep.subr.mxu0 0.0
        %813 = vmatpush1.xpose.msra.mxu0 0.0
        %814 = vmatprep.subr.mxu0 0.0
        %815 = vmatpush1.xpose.msra.mxu0 0.0
        %816 = vmatprep.subr.mxu0 0.0
        %817 = vmatpush1.xpose.msra.mxu0 0.0
        %818 = vmatprep.subr.mxu0 0.0
        %819 = vmatpush1.xpose.msra.mxu0 0.0
        %820 = vmatprep.subr.mxu0 0.0
        %821 = vmatpush1.xpose.msra.mxu0 0.0
        %822 = vmatprep.subr.mxu0 0.0
        %823 = vmatpush1.xpose.msra.mxu0 0.0
        %824 = vmatprep.subr.mxu0 0.0
        %825 = vmatpush1.xpose.msra.mxu0 0.0
        %826 = vmatprep.subr.mxu0 0.0
        %827 = vmatpush1.xpose.msra.mxu0 0.0
        %828 = vmatprep.subr.mxu0 0.0
        %829 = vmatpush1.xpose.msra.mxu0 %v796
        %830 = vmatprep.subr.mxu0 0.0
        %831 = vmatpush2.xpose.msra.mxu0 0.0
        %832 = vmatprep.subr.mxu0 0.0
        %833 = vmatpush2.xpose.msra.mxu0 0.0
        %834 = vmatprep.subr.mxu0 0.0
        %835 = vmatpush2.xpose.msra.mxu0 0.0
        %836 = vmatprep.subr.mxu0 0.0
        %837 = vmatpush2.xpose.msra.mxu0 0.0
        %838 = vmatprep.subr.mxu0 0.0
        %839 = vmatpush2.xpose.msra.mxu0 0.0
        %840 = vmatprep.subr.mxu0 0.0
        %841 = vmatpush2.xpose.msra.mxu0 0.0
        %842 = vmatprep.subr.mxu0 0.0
        %843 = vmatpush2.xpose.msra.mxu0 0.0
        %844 = vmatprep.subr.mxu0 0.0
        %845 = vmatpush2.xpose.msra.mxu0 0.0
        %846 = vmatprep.subr.mxu0 0.0
        %847 = vmatpush2.xpose.msra.mxu0 0.0
        %848 = vmatprep.subr.mxu0 0.0
        %849 = vmatpush2.xpose.msra.mxu0 0.0
        %850 = vmatprep.subr.mxu0 0.0
        %851 = vmatpush2.xpose.msra.mxu0 0.0
        %852 = vmatprep.subr.mxu0 0.0
        %853 = vmatpush2.xpose.msra.mxu0 0.0
        %854 = vmatprep.subr.mxu0 0.0
        %855 = vmatpush2.xpose.msra.mxu0 0.0
        %856 = vmatprep.subr.mxu0 0.0
        %857 = vmatpush2.xpose.msra.mxu0 0.0
        %858 = vmatprep.subr.mxu0 0.0
        %859 = vmatpush2.xpose.msra.mxu0 0.0
        %860 = vmatprep.subr.mxu0 0.0
        %861 = vmatpush2.xpose.msra.mxu0 0.0
        %862 = vmatprep.mubr.f32.mxu0 0.0
        %863 = vmatmul.mubr.f32.gmra.mxu0 %v793
        %v864 = vpop.f32.mrf.mxu0
        %v865 = vadd.f32 0.0, %v864
        %v866 = vpop.f32.mrf.mxu0
        %867 = vdwg.mxu0
        %v869 = vsel %vm335, %v318, 0
        %v872 = vsel %vm335, %v326, 0
        %874 = vmatprep.subr.mxu0 0.0
        %875 = vmatpush1.xpose.msra.mxu0 0.0
        %876 = vmatprep.subr.mxu0 0.0
        %877 = vmatpush1.xpose.msra.mxu0 0.0
        %878 = vmatprep.subr.mxu0 0.0
        %879 = vmatpush1.xpose.msra.mxu0 0.0
        %880 = vmatprep.subr.mxu0 0.0
        %881 = vmatpush1.xpose.msra.mxu0 0.0
        %882 = vmatprep.subr.mxu0 0.0
        %883 = vmatpush1.xpose.msra.mxu0 0.0
        %884 = vmatprep.subr.mxu0 0.0
        %885 = vmatpush1.xpose.msra.mxu0 0.0
        %886 = vmatprep.subr.mxu0 0.0
        %887 = vmatpush1.xpose.msra.mxu0 0.0
        %888 = vmatprep.subr.mxu0 0.0
        %889 = vmatpush1.xpose.msra.mxu0 0.0
        %890 = vmatprep.subr.mxu0 0.0
        %891 = vmatpush1.xpose.msra.mxu0 0.0
        %892 = vmatprep.subr.mxu0 0.0
        %893 = vmatpush1.xpose.msra.mxu0 0.0
        %894 = vmatprep.subr.mxu0 0.0
        %895 = vmatpush1.xpose.msra.mxu0 0.0
        %896 = vmatprep.subr.mxu0 0.0
        %897 = vmatpush1.xpose.msra.mxu0 0.0
        %898 = vmatprep.subr.mxu0 0.0
        %899 = vmatpush1.xpose.msra.mxu0 0.0
        %900 = vmatprep.subr.mxu0 0.0
        %901 = vmatpush1.xpose.msra.mxu0 0.0
        %902 = vmatprep.subr.mxu0 0.0
        %903 = vmatpush1.xpose.msra.mxu0 0.0
        %904 = vmatprep.subr.mxu0 0.0
        %905 = vmatpush1.xpose.msra.mxu0 %v872
        %906 = vmatprep.subr.mxu0 0.0
        %907 = vmatpush2.xpose.msra.mxu0 0.0
        %908 = vmatprep.subr.mxu0 0.0
        %909 = vmatpush2.xpose.msra.mxu0 0.0
        %910 = vmatprep.subr.mxu0 0.0
        %911 = vmatpush2.xpose.msra.mxu0 0.0
        %912 = vmatprep.subr.mxu0 0.0
        %913 = vmatpush2.xpose.msra.mxu0 0.0
        %914 = vmatprep.subr.mxu0 0.0
        %915 = vmatpush2.xpose.msra.mxu0 0.0
        %916 = vmatprep.subr.mxu0 0.0
        %917 = vmatpush2.xpose.msra.mxu0 0.0
        %918 = vmatprep.subr.mxu0 0.0
        %919 = vmatpush2.xpose.msra.mxu0 0.0
        %920 = vmatprep.subr.mxu0 0.0
        %921 = vmatpush2.xpose.msra.mxu0 0.0
        %922 = vmatprep.subr.mxu0 0.0
        %923 = vmatpush2.xpose.msra.mxu0 0.0
        %924 = vmatprep.subr.mxu0 0.0
        %925 = vmatpush2.xpose.msra.mxu0 0.0
        %926 = vmatprep.subr.mxu0 0.0
        %927 = vmatpush2.xpose.msra.mxu0 0.0
        %928 = vmatprep.subr.mxu0 0.0
        %929 = vmatpush2.xpose.msra.mxu0 0.0
        %930 = vmatprep.subr.mxu0 0.0
        %931 = vmatpush2.xpose.msra.mxu0 0.0
        %932 = vmatprep.subr.mxu0 0.0
        %933 = vmatpush2.xpose.msra.mxu0 0.0
        %934 = vmatprep.subr.mxu0 0.0
        %935 = vmatpush2.xpose.msra.mxu0 0.0
        %936 = vmatprep.subr.mxu0 0.0
        %937 = vmatpush2.xpose.msra.mxu0 0.0
        %938 = vmatprep.mubr.f32.mxu0 0.0
        %939 = vmatmul.mubr.f32.gmra.mxu0 %v869
        %v940 = vpop.f32.mrf.mxu0
        %v941 = vadd.f32 0.0, %v940
        %v942 = vpop.f32.mrf.mxu0
        %943 = vdwg.mxu0
        %v944 = vmul.f32 %v409, 0.25
        %v945 = vmul.f32 %v485, 0.25
        %v946 = vmul.f32 %v561, 0.25
        %v947 = vmul.f32 %v637, 0.25
        %v948 = vmul.f32 %v713, 0.25
        %v949 = vmul.f32 %v789, 0.25
        %v950 = vmul.f32 %v865, 0.25
        %v951 = vmul.f32 %v941, 0.25
        %vm952 = vcmask 64512
        %v953 = vsel %vm952, %v944, -inf
        %954 = vmax.xlane.f32.xlu0 %v953
        %v955 = vpop.xlane.xlu0 %954
        %v956 = vsel %vm952, %v945, -inf
        %957 = vmax.xlane.f32.xlu0 %v956
        %v958 = vpop.xlane.xlu0 %957
        %v959 = vsel %vm952, %v946, -inf
        %960 = vmax.xlane.f32.xlu0 %v959
        %v961 = vpop.xlane.xlu0 %960
        %v962 = vsel %vm952, %v947, -inf
        %963 = vmax.xlane.f32.xlu0 %v962
        %v964 = vpop.xlane.xlu0 %963
        %v965 = vsel %vm952, %v948, -inf
        %966 = vmax.xlane.f32.xlu0 %v965
        %v967 = vpop.xlane.xlu0 %966
        %v968 = vsel %vm952, %v949, -inf
        %969 = vmax.xlane.f32.xlu0 %v968
        %v970 = vpop.xlane.xlu0 %969
        %v971 = vsel %vm952, %v950, -inf
        %972 = vmax.xlane.f32.xlu0 %v971
        %v973 = vpop.xlane.xlu0 %972
        %v974 = vsel %vm952, %v951, -inf
        %975 = vmax.xlane.f32.xlu0 %v974
        %v976 = vpop.xlane.xlu0 %975
        %v977 = vsub.f32 %v944, %v955
        %v978 = vsub.f32 %v945, %v958
        %v979 = vsub.f32 %v946, %v961
        %v980 = vsub.f32 %v947, %v964
        %v981 = vsub.f32 %v948, %v967
        %v982 = vsub.f32 %v949, %v970
        %v983 = vsub.f32 %v950, %v973
        %v984 = vsub.f32 %v951, %v976
        %v985 = vmul.f32 %v977, 1.442695
        %v986 = vpow.pop %v985
        %v987 = vmul.f32 %v978, 1.442695
        %v988 = vpow.pop %v987
        %v989 = vmul.f32 %v979, 1.442695
        %v990 = vpow.pop %v989
        %v991 = vmul.f32 %v980, 1.442695
        %v992 = vpow.pop %v991
        %v993 = vmul.f32 %v981, 1.442695
        %v994 = vpow.pop %v993
        %v995 = vmul.f32 %v982, 1.442695
        %v996 = vpow.pop %v995
        %v997 = vmul.f32 %v983, 1.442695
        %v998 = vpow.pop %v997
        %v999 = vmul.f32 %v984, 1.442695
        %v1000 = vpow.pop %v999
        %v1001 = vsel %vm952, %v986, 0.0
        %1002 = vadd.xlane.f32.xlu0 %v1001
        %v1003 = vpop.xlane.xlu0 %1002
        %v1004 = vsel %vm952, %v988, 0.0
        %1005 = vadd.xlane.f32.xlu0 %v1004
        %v1006 = vpop.xlane.xlu0 %1005
        %v1007 = vsel %vm952, %v990, 0.0
        %1008 = vadd.xlane.f32.xlu0 %v1007
        %v1009 = vpop.xlane.xlu0 %1008
        %v1010 = vsel %vm952, %v992, 0.0
        %1011 = vadd.xlane.f32.xlu0 %v1010
        %v1012 = vpop.xlane.xlu0 %1011
        %v1013 = vsel %vm952, %v994, 0.0
        %1014 = vadd.xlane.f32.xlu0 %v1013
        %v1015 = vpop.xlane.xlu0 %1014
        %v1016 = vsel %vm952, %v996, 0.0
        %1017 = vadd.xlane.f32.xlu0 %v1016
        %v1018 = vpop.xlane.xlu0 %1017
        %v1019 = vsel %vm952, %v998, 0.0
        %1020 = vadd.xlane.f32.xlu0 %v1019
        %v1021 = vpop.xlane.xlu0 %1020
        %v1022 = vsel %vm952, %v1000, 0.0
        %1023 = vadd.xlane.f32.xlu0 %v1022
        %v1024 = vpop.xlane.xlu0 %1023
        %v1025 = vrcp.pop %v1003
        %v1026 = vrcp.pop %v1006
        %v1027 = vrcp.pop %v1009
        %v1028 = vrcp.pop %v1012
        %v1029 = vrcp.pop %v1015
        %v1030 = vrcp.pop %v1018
        %v1031 = vrcp.pop %v1021
        %v1032 = vrcp.pop %v1024
        %v1033 = vmul.f32 %v986, %v1025
        %v1034 = vmul.f32 %v988, %v1026
        %v1035 = vmul.f32 %v990, %v1027
        %v1036 = vmul.f32 %v992, %v1028
        %v1037 = vmul.f32 %v994, %v1029
        %v1038 = vmul.f32 %v996, %v1030
        %v1039 = vmul.f32 %v998, %v1031
        %v1040 = vmul.f32 %v1000, %v1032
        %1041 = vst.msk [vmem:[%s309] sm:$0xff] %vm952, %v1033
        %1042 = vst.msk [vmem:[%s309 + $0x8] sm:$0xff] %vm952, %v1034
        %1043 = vst.msk [vmem:[%s309 + $0x10] sm:$0xff] %vm952, %v1035
        %1044 = vst.msk [vmem:[%s309 + $0x18] sm:$0xff] %vm952, %v1036
        %1045 = vst.msk [vmem:[%s309 + $0x20] sm:$0xff] %vm952, %v1037
        %1046 = vst.msk [vmem:[%s309 + $0x28] sm:$0xff] %vm952, %v1038
        %1047 = vst.msk [vmem:[%s309 + $0x30] sm:$0xff] %vm952, %v1039
        %1048 = vst.msk [vmem:[%s309 + $0x38] sm:$0xff] %vm952, %v1040
        %v1050 = vsel %vm952, %v1033, 0
        %1052 = vmatprep.subr.mxu0 0.0
        %1053 = vmatpush1.msra.mxu0 0.0
        %1054 = vmatprep.subr.mxu0 0.0
        %1055 = vmatpush1.msra.mxu0 0.0
        %1056 = vmatprep.subr.mxu0 0.0
        %1057 = vmatpush1.msra.mxu0 0.0
        %1058 = vmatprep.subr.mxu0 0.0
        %1059 = vmatpush1.msra.mxu0 0.0
        %1060 = vmatprep.subr.mxu0 0.0
        %1061 = vmatpush1.msra.mxu0 0.0
        %1062 = vmatprep.subr.mxu0 0.0
        %1063 = vmatpush1.msra.mxu0 0.0
        %1064 = vmatprep.subr.mxu0 0.0
        %1065 = vmatpush1.msra.mxu0 0.0
        %1066 = vmatprep.subr.mxu0 0.0
        %1067 = vmatpush1.msra.mxu0 0.0
        %1068 = vmatprep.subr.mxu0 0.0
        %1069 = vmatpush1.msra.mxu0 0.0
        %1070 = vmatprep.subr.mxu0 0.0
        %1071 = vmatpush1.msra.mxu0 0.0
        %1072 = vmatprep.subr.mxu0 0.0
        %1073 = vmatpush1.msra.mxu0 0.0
        %1074 = vmatprep.subr.mxu0 0.0
        %1075 = vmatpush1.msra.mxu0 0.0
        %1076 = vmatprep.subr.mxu0 0.0
        %1077 = vmatpush1.msra.mxu0 0.0
        %1078 = vmatprep.subr.mxu0 0.0
        %1079 = vmatpush1.msra.mxu0 0.0
        %1080 = vmatprep.subr.mxu0 0.0
        %1081 = vmatpush1.msra.mxu0 0.0
        %1082 = vmatprep.subr.mxu0 0.0
        %1083 = vmatpush1.msra.mxu0 %v327
        %1084 = vmatprep.subr.mxu0 0.0
        %1085 = vmatpush2.msra.mxu0 0.0
        %1086 = vmatprep.subr.mxu0 0.0
        %1087 = vmatpush2.msra.mxu0 0.0
        %1088 = vmatprep.subr.mxu0 0.0
        %1089 = vmatpush2.msra.mxu0 0.0
        %1090 = vmatprep.subr.mxu0 0.0
        %1091 = vmatpush2.msra.mxu0 0.0
        %1092 = vmatprep.subr.mxu0 0.0
        %1093 = vmatpush2.msra.mxu0 0.0
        %1094 = vmatprep.subr.mxu0 0.0
        %1095 = vmatpush2.msra.mxu0 0.0
        %1096 = vmatprep.subr.mxu0 0.0
        %1097 = vmatpush2.msra.mxu0 0.0
        %1098 = vmatprep.subr.mxu0 0.0
        %1099 = vmatpush2.msra.mxu0 0.0
        %1100 = vmatprep.subr.mxu0 0.0
        %1101 = vmatpush2.msra.mxu0 0.0
        %1102 = vmatprep.subr.mxu0 0.0
        %1103 = vmatpush2.msra.mxu0 0.0
        %1104 = vmatprep.subr.mxu0 0.0
        %1105 = vmatpush2.msra.mxu0 0.0
        %1106 = vmatprep.subr.mxu0 0.0
        %1107 = vmatpush2.msra.mxu0 0.0
        %1108 = vmatprep.subr.mxu0 0.0
        %1109 = vmatpush2.msra.mxu0 0.0
        %1110 = vmatprep.subr.mxu0 0.0
        %1111 = vmatpush2.msra.mxu0 0.0
        %1112 = vmatprep.subr.mxu0 0.0
        %1113 = vmatpush2.msra.mxu0 0.0
        %1114 = vmatprep.subr.mxu0 0.0
        %1115 = vmatpush2.msra.mxu0 0.0
        %1116 = vmatprep.mubr.f32.mxu0 0.0
        %1117 = vmatmul.mubr.f32.gmra.mxu0 %v1050
        %v1118 = vpop.f32.mrf.mxu0
        %v1119 = vadd.f32 0.0, %v1118
        %v1120 = vpop.f32.mrf.mxu0
        %1121 = vdwg.mxu0
        %v1123 = vsel %vm952, %v1034, 0
        %1125 = vmatprep.subr.mxu0 0.0
        %1126 = vmatpush1.msra.mxu0 0.0
        %1127 = vmatprep.subr.mxu0 0.0
        %1128 = vmatpush1.msra.mxu0 0.0
        %1129 = vmatprep.subr.mxu0 0.0
        %1130 = vmatpush1.msra.mxu0 0.0
        %1131 = vmatprep.subr.mxu0 0.0
        %1132 = vmatpush1.msra.mxu0 0.0
        %1133 = vmatprep.subr.mxu0 0.0
        %1134 = vmatpush1.msra.mxu0 0.0
        %1135 = vmatprep.subr.mxu0 0.0
        %1136 = vmatpush1.msra.mxu0 0.0
        %1137 = vmatprep.subr.mxu0 0.0
        %1138 = vmatpush1.msra.mxu0 0.0
        %1139 = vmatprep.subr.mxu0 0.0
        %1140 = vmatpush1.msra.mxu0 0.0
        %1141 = vmatprep.subr.mxu0 0.0
        %1142 = vmatpush1.msra.mxu0 0.0
        %1143 = vmatprep.subr.mxu0 0.0
        %1144 = vmatpush1.msra.mxu0 0.0
        %1145 = vmatprep.subr.mxu0 0.0
        %1146 = vmatpush1.msra.mxu0 0.0
        %1147 = vmatprep.subr.mxu0 0.0
        %1148 = vmatpush1.msra.mxu0 0.0
        %1149 = vmatprep.subr.mxu0 0.0
        %1150 = vmatpush1.msra.mxu0 0.0
        %1151 = vmatprep.subr.mxu0 0.0
        %1152 = vmatpush1.msra.mxu0 0.0
        %1153 = vmatprep.subr.mxu0 0.0
        %1154 = vmatpush1.msra.mxu0 0.0
        %1155 = vmatprep.subr.mxu0 0.0
        %1156 = vmatpush1.msra.mxu0 %v328
        %1157 = vmatprep.subr.mxu0 0.0
        %1158 = vmatpush2.msra.mxu0 0.0
        %1159 = vmatprep.subr.mxu0 0.0
        %1160 = vmatpush2.msra.mxu0 0.0
        %1161 = vmatprep.subr.mxu0 0.0
        %1162 = vmatpush2.msra.mxu0 0.0
        %1163 = vmatprep.subr.mxu0 0.0
        %1164 = vmatpush2.msra.mxu0 0.0
        %1165 = vmatprep.subr.mxu0 0.0
        %1166 = vmatpush2.msra.mxu0 0.0
        %1167 = vmatprep.subr.mxu0 0.0
        %1168 = vmatpush2.msra.mxu0 0.0
        %1169 = vmatprep.subr.mxu0 0.0
        %1170 = vmatpush2.msra.mxu0 0.0
        %1171 = vmatprep.subr.mxu0 0.0
        %1172 = vmatpush2.msra.mxu0 0.0
        %1173 = vmatprep.subr.mxu0 0.0
        %1174 = vmatpush2.msra.mxu0 0.0
        %1175 = vmatprep.subr.mxu0 0.0
        %1176 = vmatpush2.msra.mxu0 0.0
        %1177 = vmatprep.subr.mxu0 0.0
        %1178 = vmatpush2.msra.mxu0 0.0
        %1179 = vmatprep.subr.mxu0 0.0
        %1180 = vmatpush2.msra.mxu0 0.0
        %1181 = vmatprep.subr.mxu0 0.0
        %1182 = vmatpush2.msra.mxu0 0.0
        %1183 = vmatprep.subr.mxu0 0.0
        %1184 = vmatpush2.msra.mxu0 0.0
        %1185 = vmatprep.subr.mxu0 0.0
        %1186 = vmatpush2.msra.mxu0 0.0
        %1187 = vmatprep.subr.mxu0 0.0
        %1188 = vmatpush2.msra.mxu0 0.0
        %1189 = vmatprep.mubr.f32.mxu0 0.0
        %1190 = vmatmul.mubr.f32.gmra.mxu0 %v1123
        %v1191 = vpop.f32.mrf.mxu0
        %v1192 = vadd.f32 0.0, %v1191
        %v1193 = vpop.f32.mrf.mxu0
        %1194 = vdwg.mxu0
        %v1196 = vsel %vm952, %v1035, 0
        %1198 = vmatprep.subr.mxu0 0.0
        %1199 = vmatpush1.msra.mxu0 0.0
        %1200 = vmatprep.subr.mxu0 0.0
        %1201 = vmatpush1.msra.mxu0 0.0
        %1202 = vmatprep.subr.mxu0 0.0
        %1203 = vmatpush1.msra.mxu0 0.0
        %1204 = vmatprep.subr.mxu0 0.0
        %1205 = vmatpush1.msra.mxu0 0.0
        %1206 = vmatprep.subr.mxu0 0.0
        %1207 = vmatpush1.msra.mxu0 0.0
        %1208 = vmatprep.subr.mxu0 0.0
        %1209 = vmatpush1.msra.mxu0 0.0
        %1210 = vmatprep.subr.mxu0 0.0
        %1211 = vmatpush1.msra.mxu0 0.0
        %1212 = vmatprep.subr.mxu0 0.0
        %1213 = vmatpush1.msra.mxu0 0.0
        %1214 = vmatprep.subr.mxu0 0.0
        %1215 = vmatpush1.msra.mxu0 0.0
        %1216 = vmatprep.subr.mxu0 0.0
        %1217 = vmatpush1.msra.mxu0 0.0
        %1218 = vmatprep.subr.mxu0 0.0
        %1219 = vmatpush1.msra.mxu0 0.0
        %1220 = vmatprep.subr.mxu0 0.0
        %1221 = vmatpush1.msra.mxu0 0.0
        %1222 = vmatprep.subr.mxu0 0.0
        %1223 = vmatpush1.msra.mxu0 0.0
        %1224 = vmatprep.subr.mxu0 0.0
        %1225 = vmatpush1.msra.mxu0 0.0
        %1226 = vmatprep.subr.mxu0 0.0
        %1227 = vmatpush1.msra.mxu0 0.0
        %1228 = vmatprep.subr.mxu0 0.0
        %1229 = vmatpush1.msra.mxu0 %v329
        %1230 = vmatprep.subr.mxu0 0.0
        %1231 = vmatpush2.msra.mxu0 0.0
        %1232 = vmatprep.subr.mxu0 0.0
        %1233 = vmatpush2.msra.mxu0 0.0
        %1234 = vmatprep.subr.mxu0 0.0
        %1235 = vmatpush2.msra.mxu0 0.0
        %1236 = vmatprep.subr.mxu0 0.0
        %1237 = vmatpush2.msra.mxu0 0.0
        %1238 = vmatprep.subr.mxu0 0.0
        %1239 = vmatpush2.msra.mxu0 0.0
        %1240 = vmatprep.subr.mxu0 0.0
        %1241 = vmatpush2.msra.mxu0 0.0
        %1242 = vmatprep.subr.mxu0 0.0
        %1243 = vmatpush2.msra.mxu0 0.0
        %1244 = vmatprep.subr.mxu0 0.0
        %1245 = vmatpush2.msra.mxu0 0.0
        %1246 = vmatprep.subr.mxu0 0.0
        %1247 = vmatpush2.msra.mxu0 0.0
        %1248 = vmatprep.subr.mxu0 0.0
        %1249 = vmatpush2.msra.mxu0 0.0
        %1250 = vmatprep.subr.mxu0 0.0
        %1251 = vmatpush2.msra.mxu0 0.0
        %1252 = vmatprep.subr.mxu0 0.0
        %1253 = vmatpush2.msra.mxu0 0.0
        %1254 = vmatprep.subr.mxu0 0.0
        %1255 = vmatpush2.msra.mxu0 0.0
        %1256 = vmatprep.subr.mxu0 0.0
        %1257 = vmatpush2.msra.mxu0 0.0
        %1258 = vmatprep.subr.mxu0 0.0
        %1259 = vmatpush2.msra.mxu0 0.0
        %1260 = vmatprep.subr.mxu0 0.0
        %1261 = vmatpush2.msra.mxu0 0.0
        %1262 = vmatprep.mubr.f32.mxu0 0.0
        %1263 = vmatmul.mubr.f32.gmra.mxu0 %v1196
        %v1264 = vpop.f32.mrf.mxu0
        %v1265 = vadd.f32 0.0, %v1264
        %v1266 = vpop.f32.mrf.mxu0
        %1267 = vdwg.mxu0
        %v1269 = vsel %vm952, %v1036, 0
        %1271 = vmatprep.subr.mxu0 0.0
        %1272 = vmatpush1.msra.mxu0 0.0
        %1273 = vmatprep.subr.mxu0 0.0
        %1274 = vmatpush1.msra.mxu0 0.0
        %1275 = vmatprep.subr.mxu0 0.0
        %1276 = vmatpush1.msra.mxu0 0.0
        %1277 = vmatprep.subr.mxu0 0.0
        %1278 = vmatpush1.msra.mxu0 0.0
        %1279 = vmatprep.subr.mxu0 0.0
        %1280 = vmatpush1.msra.mxu0 0.0
        %1281 = vmatprep.subr.mxu0 0.0
        %1282 = vmatpush1.msra.mxu0 0.0
        %1283 = vmatprep.subr.mxu0 0.0
        %1284 = vmatpush1.msra.mxu0 0.0
        %1285 = vmatprep.subr.mxu0 0.0
        %1286 = vmatpush1.msra.mxu0 0.0
        %1287 = vmatprep.subr.mxu0 0.0
        %1288 = vmatpush1.msra.mxu0 0.0
        %1289 = vmatprep.subr.mxu0 0.0
        %1290 = vmatpush1.msra.mxu0 0.0
        %1291 = vmatprep.subr.mxu0 0.0
        %1292 = vmatpush1.msra.mxu0 0.0
        %1293 = vmatprep.subr.mxu0 0.0
        %1294 = vmatpush1.msra.mxu0 0.0
        %1295 = vmatprep.subr.mxu0 0.0
        %1296 = vmatpush1.msra.mxu0 0.0
        %1297 = vmatprep.subr.mxu0 0.0
        %1298 = vmatpush1.msra.mxu0 0.0
        %1299 = vmatprep.subr.mxu0 0.0
        %1300 = vmatpush1.msra.mxu0 0.0
        %1301 = vmatprep.subr.mxu0 0.0
        %1302 = vmatpush1.msra.mxu0 %v330
        %1303 = vmatprep.subr.mxu0 0.0
        %1304 = vmatpush2.msra.mxu0 0.0
        %1305 = vmatprep.subr.mxu0 0.0
        %1306 = vmatpush2.msra.mxu0 0.0
        %1307 = vmatprep.subr.mxu0 0.0
        %1308 = vmatpush2.msra.mxu0 0.0
        %1309 = vmatprep.subr.mxu0 0.0
        %1310 = vmatpush2.msra.mxu0 0.0
        %1311 = vmatprep.subr.mxu0 0.0
        %1312 = vmatpush2.msra.mxu0 0.0
        %1313 = vmatprep.subr.mxu0 0.0
        %1314 = vmatpush2.msra.mxu0 0.0
        %1315 = vmatprep.subr.mxu0 0.0
        %1316 = vmatpush2.msra.mxu0 0.0
        %1317 = vmatprep.subr.mxu0 0.0
        %1318 = vmatpush2.msra.mxu0 0.0
        %1319 = vmatprep.subr.mxu0 0.0
        %1320 = vmatpush2.msra.mxu0 0.0
        %1321 = vmatprep.subr.mxu0 0.0
        %1322 = vmatpush2.msra.mxu0 0.0
        %1323 = vmatprep.subr.mxu0 0.0
        %1324 = vmatpush2.msra.mxu0 0.0
        %1325 = vmatprep.subr.mxu0 0.0
        %1326 = vmatpush2.msra.mxu0 0.0
        %1327 = vmatprep.subr.mxu0 0.0
        %1328 = vmatpush2.msra.mxu0 0.0
        %1329 = vmatprep.subr.mxu0 0.0
        %1330 = vmatpush2.msra.mxu0 0.0
        %1331 = vmatprep.subr.mxu0 0.0
        %1332 = vmatpush2.msra.mxu0 0.0
        %1333 = vmatprep.subr.mxu0 0.0
        %1334 = vmatpush2.msra.mxu0 0.0
        %1335 = vmatprep.mubr.f32.mxu0 0.0
        %1336 = vmatmul.mubr.f32.gmra.mxu0 %v1269
        %v1337 = vpop.f32.mrf.mxu0
        %v1338 = vadd.f32 0.0, %v1337
        %v1339 = vpop.f32.mrf.mxu0
        %1340 = vdwg.mxu0
        %v1342 = vsel %vm952, %v1037, 0
        %1344 = vmatprep.subr.mxu0 0.0
        %1345 = vmatpush1.msra.mxu0 0.0
        %1346 = vmatprep.subr.mxu0 0.0
        %1347 = vmatpush1.msra.mxu0 0.0
        %1348 = vmatprep.subr.mxu0 0.0
        %1349 = vmatpush1.msra.mxu0 0.0
        %1350 = vmatprep.subr.mxu0 0.0
        %1351 = vmatpush1.msra.mxu0 0.0
        %1352 = vmatprep.subr.mxu0 0.0
        %1353 = vmatpush1.msra.mxu0 0.0
        %1354 = vmatprep.subr.mxu0 0.0
        %1355 = vmatpush1.msra.mxu0 0.0
        %1356 = vmatprep.subr.mxu0 0.0
        %1357 = vmatpush1.msra.mxu0 0.0
        %1358 = vmatprep.subr.mxu0 0.0
        %1359 = vmatpush1.msra.mxu0 0.0
        %1360 = vmatprep.subr.mxu0 0.0
        %1361 = vmatpush1.msra.mxu0 0.0
        %1362 = vmatprep.subr.mxu0 0.0
        %1363 = vmatpush1.msra.mxu0 0.0
        %1364 = vmatprep.subr.mxu0 0.0
        %1365 = vmatpush1.msra.mxu0 0.0
        %1366 = vmatprep.subr.mxu0 0.0
        %1367 = vmatpush1.msra.mxu0 0.0
        %1368 = vmatprep.subr.mxu0 0.0
        %1369 = vmatpush1.msra.mxu0 0.0
        %1370 = vmatprep.subr.mxu0 0.0
        %1371 = vmatpush1.msra.mxu0 0.0
        %1372 = vmatprep.subr.mxu0 0.0
        %1373 = vmatpush1.msra.mxu0 0.0
        %1374 = vmatprep.subr.mxu0 0.0
        %1375 = vmatpush1.msra.mxu0 %v331
        %1376 = vmatprep.subr.mxu0 0.0
        %1377 = vmatpush2.msra.mxu0 0.0
        %1378 = vmatprep.subr.mxu0 0.0
        %1379 = vmatpush2.msra.mxu0 0.0
        %1380 = vmatprep.subr.mxu0 0.0
        %1381 = vmatpush2.msra.mxu0 0.0
        %1382 = vmatprep.subr.mxu0 0.0
        %1383 = vmatpush2.msra.mxu0 0.0
        %1384 = vmatprep.subr.mxu0 0.0
        %1385 = vmatpush2.msra.mxu0 0.0
        %1386 = vmatprep.subr.mxu0 0.0
        %1387 = vmatpush2.msra.mxu0 0.0
        %1388 = vmatprep.subr.mxu0 0.0
        %1389 = vmatpush2.msra.mxu0 0.0
        %1390 = vmatprep.subr.mxu0 0.0
        %1391 = vmatpush2.msra.mxu0 0.0
        %1392 = vmatprep.subr.mxu0 0.0
        %1393 = vmatpush2.msra.mxu0 0.0
        %1394 = vmatprep.subr.mxu0 0.0
        %1395 = vmatpush2.msra.mxu0 0.0
        %1396 = vmatprep.subr.mxu0 0.0
        %1397 = vmatpush2.msra.mxu0 0.0
        %1398 = vmatprep.subr.mxu0 0.0
        %1399 = vmatpush2.msra.mxu0 0.0
        %1400 = vmatprep.subr.mxu0 0.0
        %1401 = vmatpush2.msra.mxu0 0.0
        %1402 = vmatprep.subr.mxu0 0.0
        %1403 = vmatpush2.msra.mxu0 0.0
        %1404 = vmatprep.subr.mxu0 0.0
        %1405 = vmatpush2.msra.mxu0 0.0
        %1406 = vmatprep.subr.mxu0 0.0
        %1407 = vmatpush2.msra.mxu0 0.0
        %1408 = vmatprep.mubr.f32.mxu0 0.0
        %1409 = vmatmul.mubr.f32.gmra.mxu0 %v1342
        %v1410 = vpop.f32.mrf.mxu0
        %v1411 = vadd.f32 0.0, %v1410
        %v1412 = vpop.f32.mrf.mxu0
        %1413 = vdwg.mxu0
        %v1415 = vsel %vm952, %v1038, 0
        %1417 = vmatprep.subr.mxu0 0.0
        %1418 = vmatpush1.msra.mxu0 0.0
        %1419 = vmatprep.subr.mxu0 0.0
        %1420 = vmatpush1.msra.mxu0 0.0
        %1421 = vmatprep.subr.mxu0 0.0
        %1422 = vmatpush1.msra.mxu0 0.0
        %1423 = vmatprep.subr.mxu0 0.0
        %1424 = vmatpush1.msra.mxu0 0.0
        %1425 = vmatprep.subr.mxu0 0.0
        %1426 = vmatpush1.msra.mxu0 0.0
        %1427 = vmatprep.subr.mxu0 0.0
        %1428 = vmatpush1.msra.mxu0 0.0
        %1429 = vmatprep.subr.mxu0 0.0
        %1430 = vmatpush1.msra.mxu0 0.0
        %1431 = vmatprep.subr.mxu0 0.0
        %1432 = vmatpush1.msra.mxu0 0.0
        %1433 = vmatprep.subr.mxu0 0.0
        %1434 = vmatpush1.msra.mxu0 0.0
        %1435 = vmatprep.subr.mxu0 0.0
        %1436 = vmatpush1.msra.mxu0 0.0
        %1437 = vmatprep.subr.mxu0 0.0
        %1438 = vmatpush1.msra.mxu0 0.0
        %1439 = vmatprep.subr.mxu0 0.0
        %1440 = vmatpush1.msra.mxu0 0.0
        %1441 = vmatprep.subr.mxu0 0.0
        %1442 = vmatpush1.msra.mxu0 0.0
        %1443 = vmatprep.subr.mxu0 0.0
        %1444 = vmatpush1.msra.mxu0 0.0
        %1445 = vmatprep.subr.mxu0 0.0
        %1446 = vmatpush1.msra.mxu0 0.0
        %1447 = vmatprep.subr.mxu0 0.0
        %1448 = vmatpush1.msra.mxu0 %v332
        %1449 = vmatprep.subr.mxu0 0.0
        %1450 = vmatpush2.msra.mxu0 0.0
        %1451 = vmatprep.subr.mxu0 0.0
        %1452 = vmatpush2.msra.mxu0 0.0
        %1453 = vmatprep.subr.mxu0 0.0
        %1454 = vmatpush2.msra.mxu0 0.0
        %1455 = vmatprep.subr.mxu0 0.0
        %1456 = vmatpush2.msra.mxu0 0.0
        %1457 = vmatprep.subr.mxu0 0.0
        %1458 = vmatpush2.msra.mxu0 0.0
        %1459 = vmatprep.subr.mxu0 0.0
        %1460 = vmatpush2.msra.mxu0 0.0
        %1461 = vmatprep.subr.mxu0 0.0
        %1462 = vmatpush2.msra.mxu0 0.0
        %1463 = vmatprep.subr.mxu0 0.0
        %1464 = vmatpush2.msra.mxu0 0.0
        %1465 = vmatprep.subr.mxu0 0.0
        %1466 = vmatpush2.msra.mxu0 0.0
        %1467 = vmatprep.subr.mxu0 0.0
        %1468 = vmatpush2.msra.mxu0 0.0
        %1469 = vmatprep.subr.mxu0 0.0
        %1470 = vmatpush2.msra.mxu0 0.0
        %1471 = vmatprep.subr.mxu0 0.0
        %1472 = vmatpush2.msra.mxu0 0.0
        %1473 = vmatprep.subr.mxu0 0.0
        %1474 = vmatpush2.msra.mxu0 0.0
        %1475 = vmatprep.subr.mxu0 0.0
        %1476 = vmatpush2.msra.mxu0 0.0
        %1477 = vmatprep.subr.mxu0 0.0
        %1478 = vmatpush2.msra.mxu0 0.0
        %1479 = vmatprep.subr.mxu0 0.0
        %1480 = vmatpush2.msra.mxu0 0.0
        %1481 = vmatprep.mubr.f32.mxu0 0.0
        %1482 = vmatmul.mubr.f32.gmra.mxu0 %v1415
        %v1483 = vpop.f32.mrf.mxu0
        %v1484 = vadd.f32 0.0, %v1483
        %v1485 = vpop.f32.mrf.mxu0
        %1486 = vdwg.mxu0
        %v1488 = vsel %vm952, %v1039, 0
        %1490 = vmatprep.subr.mxu0 0.0
        %1491 = vmatpush1.msra.mxu0 0.0
        %1492 = vmatprep.subr.mxu0 0.0
        %1493 = vmatpush1.msra.mxu0 0.0
        %1494 = vmatprep.subr.mxu0 0.0
        %1495 = vmatpush1.msra.mxu0 0.0
        %1496 = vmatprep.subr.mxu0 0.0
        %1497 = vmatpush1.msra.mxu0 0.0
        %1498 = vmatprep.subr.mxu0 0.0
        %1499 = vmatpush1.msra.mxu0 0.0
        %1500 = vmatprep.subr.mxu0 0.0
        %1501 = vmatpush1.msra.mxu0 0.0
        %1502 = vmatprep.subr.mxu0 0.0
        %1503 = vmatpush1.msra.mxu0 0.0
        %1504 = vmatprep.subr.mxu0 0.0
        %1505 = vmatpush1.msra.mxu0 0.0
        %1506 = vmatprep.subr.mxu0 0.0
        %1507 = vmatpush1.msra.mxu0 0.0
        %1508 = vmatprep.subr.mxu0 0.0
        %1509 = vmatpush1.msra.mxu0 0.0
        %1510 = vmatprep.subr.mxu0 0.0
        %1511 = vmatpush1.msra.mxu0 0.0
        %1512 = vmatprep.subr.mxu0 0.0
        %1513 = vmatpush1.msra.mxu0 0.0
        %1514 = vmatprep.subr.mxu0 0.0
        %1515 = vmatpush1.msra.mxu0 0.0
        %1516 = vmatprep.subr.mxu0 0.0
        %1517 = vmatpush1.msra.mxu0 0.0
        %1518 = vmatprep.subr.mxu0 0.0
        %1519 = vmatpush1.msra.mxu0 0.0
        %1520 = vmatprep.subr.mxu0 0.0
        %1521 = vmatpush1.msra.mxu0 %v333
        %1522 = vmatprep.subr.mxu0 0.0
        %1523 = vmatpush2.msra.mxu0 0.0
        %1524 = vmatprep.subr.mxu0 0.0
        %1525 = vmatpush2.msra.mxu0 0.0
        %1526 = vmatprep.subr.mxu0 0.0
        %1527 = vmatpush2.msra.mxu0 0.0
        %1528 = vmatprep.subr.mxu0 0.0
        %1529 = vmatpush2.msra.mxu0 0.0
        %1530 = vmatprep.subr.mxu0 0.0
        %1531 = vmatpush2.msra.mxu0 0.0
        %1532 = vmatprep.subr.mxu0 0.0
        %1533 = vmatpush2.msra.mxu0 0.0
        %1534 = vmatprep.subr.mxu0 0.0
        %1535 = vmatpush2.msra.mxu0 0.0
        %1536 = vmatprep.subr.mxu0 0.0
        %1537 = vmatpush2.msra.mxu0 0.0
        %1538 = vmatprep.subr.mxu0 0.0
        %1539 = vmatpush2.msra.mxu0 0.0
        %1540 = vmatprep.subr.mxu0 0.0
        %1541 = vmatpush2.msra.mxu0 0.0
        %1542 = vmatprep.subr.mxu0 0.0
        %1543 = vmatpush2.msra.mxu0 0.0
        %1544 = vmatprep.subr.mxu0 0.0
        %1545 = vmatpush2.msra.mxu0 0.0
        %1546 = vmatprep.subr.mxu0 0.0
        %1547 = vmatpush2.msra.mxu0 0.0
        %1548 = vmatprep.subr.mxu0 0.0
        %1549 = vmatpush2.msra.mxu0 0.0
        %1550 = vmatprep.subr.mxu0 0.0
        %1551 = vmatpush2.msra.mxu0 0.0
        %1552 = vmatprep.subr.mxu0 0.0
        %1553 = vmatpush2.msra.mxu0 0.0
        %1554 = vmatprep.mubr.f32.mxu0 0.0
        %1555 = vmatmul.mubr.f32.gmra.mxu0 %v1488
        %v1556 = vpop.f32.mrf.mxu0
        %v1557 = vadd.f32 0.0, %v1556
        %v1558 = vpop.f32.mrf.mxu0
        %1559 = vdwg.mxu0
        %v1561 = vsel %vm952, %v1040, 0
        %1563 = vmatprep.subr.mxu0 0.0
        %1564 = vmatpush1.msra.mxu0 0.0
        %1565 = vmatprep.subr.mxu0 0.0
        %1566 = vmatpush1.msra.mxu0 0.0
        %1567 = vmatprep.subr.mxu0 0.0
        %1568 = vmatpush1.msra.mxu0 0.0
        %1569 = vmatprep.subr.mxu0 0.0
        %1570 = vmatpush1.msra.mxu0 0.0
        %1571 = vmatprep.subr.mxu0 0.0
        %1572 = vmatpush1.msra.mxu0 0.0
        %1573 = vmatprep.subr.mxu0 0.0
        %1574 = vmatpush1.msra.mxu0 0.0
        %1575 = vmatprep.subr.mxu0 0.0
        %1576 = vmatpush1.msra.mxu0 0.0
        %1577 = vmatprep.subr.mxu0 0.0
        %1578 = vmatpush1.msra.mxu0 0.0
        %1579 = vmatprep.subr.mxu0 0.0
        %1580 = vmatpush1.msra.mxu0 0.0
        %1581 = vmatprep.subr.mxu0 0.0
        %1582 = vmatpush1.msra.mxu0 0.0
        %1583 = vmatprep.subr.mxu0 0.0
        %1584 = vmatpush1.msra.mxu0 0.0
        %1585 = vmatprep.subr.mxu0 0.0
        %1586 = vmatpush1.msra.mxu0 0.0
        %1587 = vmatprep.subr.mxu0 0.0
        %1588 = vmatpush1.msra.mxu0 0.0
        %1589 = vmatprep.subr.mxu0 0.0
        %1590 = vmatpush1.msra.mxu0 0.0
        %1591 = vmatprep.subr.mxu0 0.0
        %1592 = vmatpush1.msra.mxu0 0.0
        %1593 = vmatprep.subr.mxu0 0.0
        %1594 = vmatpush1.msra.mxu0 %v334
        %1595 = vmatprep.subr.mxu0 0.0
        %1596 = vmatpush2.msra.mxu0 0.0
        %1597 = vmatprep.subr.mxu0 0.0
        %1598 = vmatpush2.msra.mxu0 0.0
        %1599 = vmatprep.subr.mxu0 0.0
        %1600 = vmatpush2.msra.mxu0 0.0
        %1601 = vmatprep.subr.mxu0 0.0
        %1602 = vmatpush2.msra.mxu0 0.0
        %1603 = vmatprep.subr.mxu0 0.0
        %1604 = vmatpush2.msra.mxu0 0.0
        %1605 = vmatprep.subr.mxu0 0.0
        %1606 = vmatpush2.msra.mxu0 0.0
        %1607 = vmatprep.subr.mxu0 0.0
        %1608 = vmatpush2.msra.mxu0 0.0
        %1609 = vmatprep.subr.mxu0 0.0
        %1610 = vmatpush2.msra.mxu0 0.0
        %1611 = vmatprep.subr.mxu0 0.0
        %1612 = vmatpush2.msra.mxu0 0.0
        %1613 = vmatprep.subr.mxu0 0.0
        %1614 = vmatpush2.msra.mxu0 0.0
        %1615 = vmatprep.subr.mxu0 0.0
        %1616 = vmatpush2.msra.mxu0 0.0
        %1617 = vmatprep.subr.mxu0 0.0
        %1618 = vmatpush2.msra.mxu0 0.0
        %1619 = vmatprep.subr.mxu0 0.0
        %1620 = vmatpush2.msra.mxu0 0.0
        %1621 = vmatprep.subr.mxu0 0.0
        %1622 = vmatpush2.msra.mxu0 0.0
        %1623 = vmatprep.subr.mxu0 0.0
        %1624 = vmatpush2.msra.mxu0 0.0
        %1625 = vmatprep.subr.mxu0 0.0
        %1626 = vmatpush2.msra.mxu0 0.0
        %1627 = vmatprep.mubr.f32.mxu0 0.0
        %1628 = vmatmul.mubr.f32.gmra.mxu0 %v1561
        %v1629 = vpop.f32.mrf.mxu0
        %v1630 = vadd.f32 0.0, %v1629
        %v1631 = vpop.f32.mrf.mxu0
        %1632 = vdwg.mxu0
        %1633 = vst.msk [vmem:[%s293] sm:$0xff] %vm335, %v1119
        %1634 = vst.msk [vmem:[%s293 + $0x8] sm:$0xff] %vm335, %v1192
        %1635 = vst.msk [vmem:[%s293 + $0x10] sm:$0xff] %vm335, %v1265
        %1636 = vst.msk [vmem:[%s293 + $0x18] sm:$0xff] %vm335, %v1338
        %1637 = vst.msk [vmem:[%s293 + $0x20] sm:$0xff] %vm335, %v1411
        %1638 = vst.msk [vmem:[%s293 + $0x28] sm:$0xff] %vm335, %v1484
        %1639 = vst.msk [vmem:[%s293 + $0x30] sm:$0xff] %vm335, %v1557
        %1640 = vst.msk [vmem:[%s293 + $0x38] sm:$0xff] %vm335, %v1630
        %s1641 = sand.u32 %s111, 1
        %s1642 = scalar_lea.sflag [#allocation4], %s1641
        %s1643 = sand.u32 %s111, 1
        %s1644 = smul.addr %s1643, 64
        %s1645 = scalar_lea.vmem [#allocation8], %s1644
        %s1646 = smul.u32 8, %s25
        %p1647 = scmp.lt.s32.totalorder %s1646, 15
        %s1648 = scalar_select %p1647, %s1646, 15
        %s1649 = smul.addr %s1648, 8
        %s1650 = scalar_lea.vmem %s4, %s1649
        // Predicated region
        $region45: #{tpu_custom_call.1} parent=31 // pred_check
          %p1651 = pneg %p121
        $region46: #{tpu_custom_call.1} parent=31 // pred_check_branch
          %1653 = sbr.rel (%p1651) target = $region48
        $region47: #{tpu_custom_call.1} parent=31 // pred_region
          %s1654 = smul.u32 8, %s25
          %s1656 = ssub.s32 1024, 1024
          %1657 = vsyncadd %s1642, %s1656
          %s1658 = smul.addr %s1654, 128
          %s1659 = scalar_lea.hbm %s3, %s1658
          %s1660 = sshll.u32 %s1645, 4
          %s1661 = int_to_ptr.vmem [resolvable:$true] %s1660
          %1666 = dma.vmem_to_hbm [thread:$0]  %s1661, 1024, %s1659, %s1642, 128, 128, 8
        $region48: #{tpu_custom_call.1} parent=31 // pred_fallthru
          _
        // Predicated region
        $region49: #{tpu_custom_call.1} parent=31 // pred_check
          %p1667 = pneg %p147
        $region50: #{tpu_custom_call.1} parent=31 // pred_check_branch
          %1669 = sbr.rel (%p1667) target = $region52
        $region51: #{tpu_custom_call.1} parent=31 // pred_region
          %s1670 = smul.u32 8, %s25
        $region52: #{tpu_custom_call.1} parent=31 // pred_fallthru
          _
      $region32: #{tpu_custom_call.1} parent=5 // pred_fallthru
        _
      %p1671 = scmp.le.s32.totalorder 2, %s20
      // Predicated region
      $region53: #{tpu_custom_call.1} parent=5 // pred_check
        %p1672 = pneg %p1671
      $region54: #{tpu_custom_call.1} parent=5 // pred_check_branch
        %1674 = sbr.rel (%p1672) target = $region56
      $region55: #{tpu_custom_call.1} parent=5 // pred_region
        %s1675 = ssub.s32 %s20, 2
        // Predicated region
        $region57: #{tpu_custom_call.1} parent=55 // pred_check
          %p1676 = pneg %p127
        $region58: #{tpu_custom_call.1} parent=55 // pred_check_branch
          %1678 = sbr.rel (%p1676) target = $region60
        $region59: #{tpu_custom_call.1} parent=55 // pred_region
          %s1679 = sand.u32 %s112, 1
          %s1680 = scalar_lea.sflag [#allocation4], %s1679
          %s1681 = sand.u32 %s112, 1
          %s1682 = smul.addr %s1681, 64
          %s1683 = scalar_lea.vmem [#allocation8], %s1682
          %1684 = dma.done %s1680, 1024
        $region60: #{tpu_custom_call.1} parent=55 // pred_fallthru
          _
        // Predicated region
        $region61: #{tpu_custom_call.1} parent=55 // pred_check
          %p1685 = pneg %p153
        $region62: #{tpu_custom_call.1} parent=55 // pred_check_branch
          %1687 = sbr.rel (%p1685) target = $region64
        $region63: #{tpu_custom_call.1} parent=55 // pred_region
          %s1688 = smul.u32 8, %s26
          %p1689 = scmp.lt.s32.totalorder %s1688, 15
          %s1690 = scalar_select %p1689, %s1688, 15
          %s1691 = smul.addr %s1690, 8
          %s1692 = scalar_lea.vmem %s4, %s1691
        $region64: #{tpu_custom_call.1} parent=55 // pred_fallthru
          _
      $region56: #{tpu_custom_call.1} parent=5 // pred_fallthru
        _
    $region6: #{tpu_custom_call.1} parent=1 // loop_footer
      %s24 = sadd.s32 1, %s20
    $region7: #{tpu_custom_call.1} parent=1 // loop_footer_branch
      %19 = sbr.rel target = $region3
    $region8: #{tpu_custom_call.1} parent=1 // loop_exit
      _
    %1693 = vsyncpa [#allocation3], 1
    %s1694 = scalar_lea.sflag [#allocation3], 1
    %1695 = vsyncpa %s1694, 1
    %1696 = vsyncpa [#allocation6], 1
    %s1697 = scalar_lea.sflag [#allocation6], 1
    %1698 = vsyncpa %s1697, 1
    %1699 = vsyncpa [#allocation4], 1
    %s1700 = scalar_lea.sflag [#allocation4], 1
    %1701 = vsyncpa %s1700, 1

</llo_original>
